<compile_context>
chip_gen: v6e
topology: v6e:2x2x1
jax: 0.10.0
libtpu: 0.0.40
codegen_flags: <defaults>
</compile_context>

<pallas_src>
import functools

import jax
import jax.numpy as jnp
from jax.experimental import pallas as pl
from jax.experimental.pallas import tpu as pltpu

GEM_EPS = 1e-6
GEM_P = 3.0


def _round_up(x, m):
    return (x + m - 1) // m * m


# ----------------------------------------------------------------------------- kernel

def _fused_enet_kernel(x_ref, w1_ref, s1_ref, b1_ref, w2_ref, s2_ref, b2_ref,
                       wn_ref, bns_ref, bnb_ref, wh_ref, bh_ref,
                       feat_ref, aux_ref, acc_ref, *, tile_m, hw):
    """stem conv (im2col matmul) + BN + SiLU -> head conv (1x1 matmul) + BN + SiLU
    -> GeM(p=3) grid reduction -> neck Linear -> BatchNorm1d -> aux head."""
    t = pl.program_id(1)

    @pl.when(t == 0)
    def _init():
        acc_ref[...] = jnp.zeros_like(acc_ref)

    x = x_ref[0]                                                        # [tile_m, Kp] bf16
    # conv_stem as matmul + folded bn1 + SiLU
    y1 = jnp.dot(x, w1_ref[...], preferred_element_type=jnp.float32)   # [tile_m, N1p]
    y1 = y1 * s1_ref[...] + b1_ref[...]
    y1 = y1 * jax.nn.sigmoid(y1)
    # conv_head (1x1) as matmul + folded bn2 + SiLU
    y2 = jnp.dot(y1.astype(jnp.bfloat16), w2_ref[...],
                 preferred_element_type=jnp.float32)                    # [tile_m, N2p]
    y2 = y2 * s2_ref[...] + b2_ref[...]
    y2 = y2 * jax.nn.sigmoid(y2)

    # GeM accumulation: clamp, cube, mask rows that are pure M-padding, sum.
    y2 = jnp.maximum(y2, GEM_EPS)
    y3 = y2 * y2 * y2
    rid = t * tile_m + jax.lax.broadcasted_iota(jnp.int32, (tile_m, 1), 0)
    y3 = jnp.where(rid < hw, y3, 0.0)
    acc_ref[...] += jnp.sum(y3, axis=0, keepdims=True)                  # [1, N2p] f32

    @pl.when(t == pl.num_programs(1) - 1)
    def _finalize():
        m = acc_ref[...] * (1.0 / hw)                 # adaptive avg pool (mean over HW)
        pooled = jnp.exp(jnp.log(m) / GEM_P)          # m ** (1/p); m > 0 by clamp, f32
        # dropout(p=0) in eval mode -> identity
        # neck (Linear, no bias) + bottleneck (BatchNorm1d eval, folded)
        g = jnp.dot(pooled, wn_ref[...], preferred_element_type=jnp.float32)   # [1, FD]
        feat = g * bns_ref[...] + bnb_ref[...]
        feat_ref[0] = feat
        # aux head (Linear + bias)
        aux_ref[0] = (jnp.dot(feat, wh_ref[...], preferred_element_type=jnp.float32)
                      + bh_ref[...])


# ----------------------------------------------------------------------------- glue

def _fused_enet(cols, w1, s1, b1, w2, s2, b2, wn, bns, bnb, wh, bh, *, hw, tile_m):
    B, Mp, Kp = cols.shape
    N1p = w1.shape[1]
    N2p = w2.shape[1]
    FD = wn.shape[1]
    NA = wh.shape[1]
    n_tiles = Mp // tile_m

    flops = (2 * B * Mp * Kp * N1p + 2 * B * Mp * N1p * N2p
             + 2 * B * N2p * FD + 2 * B * FD * NA)
    transcendentals = B * Mp * (N1p + N2p) + B * N2p
    bytes_accessed = (cols.size * 2 + (w1.size + w2.size) * 2
                      + (s1.size + b1.size + s2.size + b2.size) * 4
                      + (wn.size + bns.size + bnb.size + wh.size + bh.size) * 4
                      + B * (FD + NA) * 4)

    grid_spec = pltpu.PrefetchScalarGridSpec(
        num_scalar_prefetch=0,
        grid=(B, n_tiles),
        in_specs=[
            pl.BlockSpec((1, tile_m, Kp), lambda b, t: (b, t, 0)),   # im2col row tile
            pl.BlockSpec((Kp, N1p), lambda b, t: (0, 0)),            # w_stem (resident)
            pl.BlockSpec((1, N1p), lambda b, t: (0, 0)),             # bn1 scale
            pl.BlockSpec((1, N1p), lambda b, t: (0, 0)),             # bn1 bias
            pl.BlockSpec((N1p, N2p), lambda b, t: (0, 0)),           # w_head_conv
            pl.BlockSpec((1, N2p), lambda b, t: (0, 0)),             # bn2 scale
            pl.BlockSpec((1, N2p), lambda b, t: (0, 0)),             # bn2 bias
            pl.BlockSpec((N2p, FD), lambda b, t: (0, 0)),            # w_neck
            pl.BlockSpec((1, FD), lambda b, t: (0, 0)),              # bneck scale
            pl.BlockSpec((1, FD), lambda b, t: (0, 0)),              # bneck bias
            pl.BlockSpec((FD, NA), lambda b, t: (0, 0)),             # w_aux
            pl.BlockSpec((1, NA), lambda b, t: (0, 0)),              # b_aux
        ],
        out_specs=(
            pl.BlockSpec((1, 1, FD), lambda b, t: (b, 0, 0)),        # feat row b
            pl.BlockSpec((1, 1, NA), lambda b, t: (b, 0, 0)),        # aux row b
        ),
        scratch_shapes=[pltpu.VMEM((1, N2p), jnp.float32)],          # GeM accumulator
    )

    feat, aux = pl.pallas_call(
        functools.partial(_fused_enet_kernel, tile_m=tile_m, hw=hw),
        out_shape=(jax.ShapeDtypeStruct((B, 1, FD), jnp.float32),
                   jax.ShapeDtypeStruct((B, 1, NA), jnp.float32)),
        grid_spec=grid_spec,
        compiler_params=pltpu.CompilerParams(
            dimension_semantics=("parallel", "arbitrary"),
            vmem_limit_bytes=32 * 1024 * 1024),
        cost_estimate=pl.CostEstimate(flops=flops,
                                      transcendentals=transcendentals,
                                      bytes_accessed=bytes_accessed),
    )(cols, w1, s1, b1, w2, s2, b2, wn, bns, bnb, wh, bh)
    return feat[:, 0, :], aux[:, 0, :]


def _im2col(x_nhwc, k, stride, pad):
    """x: [B,H,W,C] -> [B, Ho*Wo, k*k*C] patches (row-major over (kh,kw,C))."""
    B, H, W, C = x_nhwc.shape
    xp = jnp.pad(x_nhwc, ((0, 0), (pad, pad), (pad, pad), (0, 0)))
    Ho = (H + 2 * pad - k) // stride + 1
    Wo = (W + 2 * pad - k) // stride + 1
    patches = []
    for i in range(k):
        for j in range(k):
            patches.append(xp[:, i:i + stride * Ho:stride, j:j + stride * Wo:stride, :])
    cols = jnp.stack(patches, axis=3)                # [B,Ho,Wo,k*k,C]
    return cols.reshape(B, Ho * Wo, k * k * C), Ho, Wo


def _fold_bn(gamma, beta, mean, var, eps=1e-5):
    # NOTE: timm TF-ported EfficientNet BNs often use eps=1e-3; pass eps= accordingly
    # when loading a real checkpoint.
    scale = gamma / jnp.sqrt(var + eps)
    bias = beta - mean * scale
    return scale[None, :], bias[None, :]


def _pad2(a, rows, cols):
    return jnp.pad(a, ((0, rows - a.shape[0]), (0, cols - a.shape[1])))


# ----------------------------------------------------------------------------- model

def make_enet_params(key, c_in=4, stem_ch=16, num_features=32, feat_dim=32, num_aux=23):
    ks = jax.random.split(key, 12)
    p = {}
    # conv_stem: 3x3 stride 2, no bias (timm conv_stem has no bias)
    p["w_stem"] = 0.1 * jax.random.normal(ks[0], (3 * 3 * c_in, stem_ch), jnp.float32)
    p["bn1_gamma"] = 1.0 + 0.05 * jax.random.normal(ks[1], (stem_ch,), jnp.float32)
    p["bn1_beta"] = 0.05 * jax.random.normal(ks[2], (stem_ch,), jnp.float32)
    p["bn1_mean"] = 0.05 * jax.random.normal(ks[3], (stem_ch,), jnp.float32)
    p["bn1_var"] = 1.0 + 0.1 * jnp.abs(jax.random.normal(ks[4], (stem_ch,), jnp.float32))
    # conv_head: 1x1, no bias
    p["w_head_conv"] = 0.1 * jax.random.normal(ks[5], (stem_ch, num_features), jnp.float32)
    p["bn2_gamma"] = 1.0 + 0.05 * jax.random.normal(ks[6], (num_features,), jnp.float32)
    p["bn2_beta"] = 0.05 * jax.random.normal(ks[7], (num_features,), jnp.float32)
    p["bn2_mean"] = 0.05 * jax.random.normal(ks[8], (num_features,), jnp.float32)
    p["bn2_var"] = 1.0 + 0.1 * jnp.abs(jax.random.normal(ks[9], (num_features,), jnp.float32))
    # neck: Linear(num_features, feat_dim, bias=False)
    p["w_neck"] = 0.02 * jax.random.normal(ks[10], (num_features, feat_dim), jnp.float32)
    # bottleneck: BatchNorm1d(feat_dim), eval mode
    p["bneck_gamma"] = jnp.ones((feat_dim,), jnp.float32)
    p["bneck_beta"] = jnp.zeros((feat_dim,), jnp.float32)
    p["bneck_mean"] = jnp.zeros((feat_dim,), jnp.float32)
    p["bneck_var"] = jnp.ones((feat_dim,), jnp.float32)
    # head: Linear(feat_dim, num_aux) with bias
    p["w_aux"] = 0.02 * jax.random.normal(ks[11], (feat_dim, num_aux), jnp.float32)
    p["b_aux"] = jnp.zeros((num_aux,), jnp.float32)
    return p


def enet_forward(x_nchw, p):
    """Eval-mode ENet.forward: returns (feat, aux_score)."""
    x = jnp.transpose(x_nchw, (0, 2, 3, 1)).astype(jnp.float32)     # NCHW -> NHWC

    # --- im2col for conv_stem (3x3, stride 2, pad 1) --------------------------------
    # TODO(synk): move patch extraction into the kernel (shifted row-strip views) so
    #             the expanded slab never touches HBM.
    cols, Ho, Wo = _im2col(x, k=3, stride=2, pad=1)
    HW = Ho * Wo
    Kc = cols.shape[-1]

    # --- lane/sublane-aligned, bf16 operands ----------------------------------------
    Kp = _round_up(Kc, 128)
    N1 = p["w_stem"].shape[1]
    N2 = p["w_head_conv"].shape[1]
    N1p = _round_up(N1, 128)
    N2p = _round_up(N2, 128)

    tile_m = min(512, _round_up(HW, 8))          # rows per grid step (multiple of 8)
    n_tiles = -(-HW // tile_m)
    Mp = n_tiles * tile_m

    cols_p = jnp.pad(cols, ((0, 0), (0, Mp - HW), (0, Kp - Kc))).astype(jnp.bfloat16)

    s1, b1 = _fold_bn(p["bn1_gamma"], p["bn1_beta"], p["bn1_mean"], p["bn1_var"])
    s2, b2 = _fold_bn(p["bn2_gamma"], p["bn2_beta"], p["bn2_mean"], p["bn2_var"])
    bns, bnb = _fold_bn(p["bneck_gamma"], p["bneck_beta"], p["bneck_mean"], p["bneck_var"])

    w1p = _pad2(p["w_stem"], Kp, N1p).astype(jnp.bfloat16)
    s1p = _pad2(s1, 1, N1p)
    b1p = _pad2(b1, 1, N1p)
    w2p = _pad2(p["w_head_conv"], N1p, N2p).astype(jnp.bfloat16)
    s2p = _pad2(s2, 1, N2p)
    b2p = _pad2(b2, 1, N2p)
    wnp = _pad2(p["w_neck"], N2p, p["w_neck"].shape[1])          # zero rows -> no effect
    wh = p["w_aux"]
    bh = p["b_aux"][None, :]

    # --- single fused kernel: conv+BN+SiLU x2 -> GeM -> neck -> BN1d -> head --------
    feat, aux_score = _fused_enet(cols_p, w1p, s1p, b1p, w2p, s2p, b2p,
                                  wnp, bns, bnb, wh, bh, hw=HW, tile_m=tile_m)
    return feat, aux_score


# ----------------------------------------------------------------------------- main

if __name__ == "__main__":
    key = jax.random.PRNGKey(0)
    k_x, k_p = jax.random.split(key)

    B, C, H, W = 2, 4, 16, 16
    x = jax.random.normal(k_x, (B, C, H, W), jnp.float32)

    params = make_enet_params(k_p, c_in=C, stem_ch=16, num_features=32,
                              feat_dim=32, num_aux=23)

    feat, aux_score = jax.jit(enet_forward)(x, params)
    jax.block_until_ready((feat, aux_score))

    assert feat.shape == (B, 32) and aux_score.shape == (B, 23)
    assert jnp.all(jnp.isfinite(feat)) and jnp.all(jnp.isfinite(aux_score))
    print("KERNEL_OK")
</pallas_src>

<mosaic_0001>
module attributes {stable_mosaic.version = 11 : i64} {
  func.func @_fused_enet_kernel(%arg0: i32, %arg1: i32, %arg2: memref<1x64x128xbf16, #tpu.memory_space<vmem>>, %arg3: memref<128x128xbf16, #tpu.memory_space<vmem>>, %arg4: memref<1x128xf32, #tpu.memory_space<vmem>>, %arg5: memref<1x128xf32, #tpu.memory_space<vmem>>, %arg6: memref<128x128xbf16, #tpu.memory_space<vmem>>, %arg7: memref<1x128xf32, #tpu.memory_space<vmem>>, %arg8: memref<1x128xf32, #tpu.memory_space<vmem>>, %arg9: memref<128x32xf32, #tpu.memory_space<vmem>>, %arg10: memref<1x32xf32, #tpu.memory_space<vmem>>, %arg11: memref<1x32xf32, #tpu.memory_space<vmem>>, %arg12: memref<32x23xf32, #tpu.memory_space<vmem>>, %arg13: memref<1x23xf32, #tpu.memory_space<vmem>>, %arg14: memref<1x1x32xf32, #tpu.memory_space<vmem>>, %arg15: memref<1x1x23xf32, #tpu.memory_space<vmem>>, %arg16: memref<1x128xf32, #tpu.memory_space<vmem>>) attributes {dimension_semantics = [#tpu.dimension_semantics<parallel>, #tpu.dimension_semantics<arbitrary>], iteration_bounds = array<i64: 2, 1>, scalar_prefetch = 0 : i64, scratch_operands = 1 : i64, tpu.core_type = #tpu.core_type<tc>, window_params = [{transform_indices = @transform_0, window_bounds = array<i64: 1, 64, 128>}, {pipeline_mode = #tpu.pipeline_mode<synchronous>, transform_indices = @transform_1, window_bounds = array<i64: 128, 128>}, {pipeline_mode = #tpu.pipeline_mode<synchronous>, transform_indices = @transform_2, window_bounds = array<i64: 1, 128>}, {pipeline_mode = #tpu.pipeline_mode<synchronous>, transform_indices = @transform_3, window_bounds = array<i64: 1, 128>}, {pipeline_mode = #tpu.pipeline_mode<synchronous>, transform_indices = @transform_4, window_bounds = array<i64: 128, 128>}, {pipeline_mode = #tpu.pipeline_mode<synchronous>, transform_indices = @transform_5, window_bounds = array<i64: 1, 128>}, {pipeline_mode = #tpu.pipeline_mode<synchronous>, transform_indices = @transform_6, window_bounds = array<i64: 1, 128>}, {pipeline_mode = #tpu.pipeline_mode<synchronous>, transform_indices = @transform_7, window_bounds = array<i64: 128, 32>}, {pipeline_mode = #tpu.pipeline_mode<synchronous>, transform_indices = @transform_8, window_bounds = array<i64: 1, 32>}, {pipeline_mode = #tpu.pipeline_mode<synchronous>, transform_indices = @transform_9, window_bounds = array<i64: 1, 32>}, {pipeline_mode = #tpu.pipeline_mode<synchronous>, transform_indices = @transform_10, window_bounds = array<i64: 32, 23>}, {pipeline_mode = #tpu.pipeline_mode<synchronous>, transform_indices = @transform_11, window_bounds = array<i64: 1, 23>}, {transform_indices = @transform_12, window_bounds = array<i64: 1, 1, 32>}, {transform_indices = @transform_13, window_bounds = array<i64: 1, 1, 23>}]} {
    %c0_i32 = arith.constant 0 : i32
    %0 = arith.cmpi eq, %arg1, %c0_i32 : i32
    %1 = arith.extui %0 : i1 to i32
    %c0_i32_0 = arith.constant 0 : i32
    %2 = arith.cmpi ne, %1, %c0_i32_0 : i32
    scf.if %2 {
      %cst_28 = arith.constant 0.000000e+00 : f32
      %56 = vector.broadcast %cst_28 : f32 to vector<1x128xf32>
      %c0_29 = arith.constant 0 : index
      %c0_30 = arith.constant 0 : index
      %57 = vector.load %arg16[%c0_29, %c0_30] : memref<1x128xf32, #tpu.memory_space<vmem>>, vector<1x128xf32>
      tpu.vector_store %arg16[%c0_29, %c0_30], %56 {strides = array<i32>} : memref<1x128xf32, #tpu.memory_space<vmem>>, vector<1x128xf32>,
    } else {
    }
    %c0 = arith.constant 0 : index
    %c0_1 = arith.constant 0 : index
    %c0_2 = arith.constant 0 : index
    %3 = vector.load %arg2[%c0, %c0_1, %c0_2] : memref<1x64x128xbf16, #tpu.memory_space<vmem>>, vector<1x64x128xbf16>
    %4 = vector.shape_cast %3 : vector<1x64x128xbf16> to vector<64x128xbf16>
    %c0_3 = arith.constant 0 : index
    %c0_4 = arith.constant 0 : index
    %5 = vector.load %arg3[%c0_3, %c0_4] : memref<128x128xbf16, #tpu.memory_space<vmem>>, vector<128x128xbf16>
    %cst = arith.constant dense<0.000000e+00> : vector<64x128xf32>
    %6 = tpu.matmul %4, %5, %cst {dimension_numbers = #tpu.dot_dimension_numbers<[1], [0], [0], [1], [0, 0, 1, 1], [], []>} : vector<64x128xbf16>, vector<128x128xbf16>, vector<64x128xf32> -> vector<64x128xf32>
    %c0_5 = arith.constant 0 : index
    %c0_6 = arith.constant 0 : index
    %7 = vector.load %arg4[%c0_5, %c0_6] : memref<1x128xf32, #tpu.memory_space<vmem>>, vector<1x128xf32>
    %8 = vector.broadcast %7 : vector<1x128xf32> to vector<64x128xf32>
    %9 = arith.mulf %6, %8 : vector<64x128xf32>
    %c0_7 = arith.constant 0 : index
    %c0_8 = arith.constant 0 : index
    %10 = vector.load %arg5[%c0_7, %c0_8] : memref<1x128xf32, #tpu.memory_space<vmem>>, vector<1x128xf32>
    %11 = vector.broadcast %10 : vector<1x128xf32> to vector<64x128xf32>
    %12 = arith.addf %9, %11 : vector<64x128xf32>
    %13 = arith.negf %12 : vector<64x128xf32>
    %14 = math.exp %13 : vector<64x128xf32>
    %cst_9 = arith.constant 1.000000e+00 : f32
    %15 = vector.broadcast %cst_9 : f32 to vector<64x128xf32>
    %16 = arith.addf %15, %14 : vector<64x128xf32>
    %17 = arith.divf %15, %16 : vector<64x128xf32>
    %18 = arith.mulf %12, %17 : vector<64x128xf32>
    %19 = arith.truncf %18 : vector<64x128xf32> to vector<64x128xbf16>
    %c0_10 = arith.constant 0 : index
    %c0_11 = arith.constant 0 : index
    %20 = vector.load %arg6[%c0_10, %c0_11] : memref<128x128xbf16, #tpu.memory_space<vmem>>, vector<128x128xbf16>
    %cst_12 = arith.constant dense<0.000000e+00> : vector<64x128xf32>
    %21 = tpu.matmul %19, %20, %cst_12 {dimension_numbers = #tpu.dot_dimension_numbers<[1], [0], [0], [1], [0, 0, 1, 1], [], []>} : vector<64x128xbf16>, vector<128x128xbf16>, vector<64x128xf32> -> vector<64x128xf32>
    %c0_13 = arith.constant 0 : index
    %c0_14 = arith.constant 0 : index
    %22 = vector.load %arg7[%c0_13, %c0_14] : memref<1x128xf32, #tpu.memory_space<vmem>>, vector<1x128xf32>
    %23 = vector.broadcast %22 : vector<1x128xf32> to vector<64x128xf32>
    %24 = arith.mulf %21, %23 : vector<64x128xf32>
    %c0_15 = arith.constant 0 : index
    %c0_16 = arith.constant 0 : index
    %25 = vector.load %arg8[%c0_15, %c0_16] : memref<1x128xf32, #tpu.memory_space<vmem>>, vector<1x128xf32>
    %26 = vector.broadcast %25 : vector<1x128xf32> to vector<64x128xf32>
    %27 = arith.addf %24, %26 : vector<64x128xf32>
    %28 = arith.negf %27 : vector<64x128xf32>
    %29 = math.exp %28 : vector<64x128xf32>
    %cst_17 = arith.constant 1.000000e+00 : f32
    %30 = vector.broadcast %cst_17 : f32 to vector<64x128xf32>
    %31 = arith.addf %30, %29 : vector<64x128xf32>
    %32 = arith.divf %30, %31 : vector<64x128xf32>
    %33 = arith.mulf %27, %32 : vector<64x128xf32>
    %cst_18 = arith.constant 9.99999997E-7 : f32
    %34 = vector.broadcast %cst_18 : f32 to vector<64x128xf32>
    %35 = arith.maximumf %33, %34 : vector<64x128xf32>
    %36 = arith.mulf %35, %35 : vector<64x128xf32>
    %37 = arith.mulf %36, %35 : vector<64x128xf32>
    %c64_i32 = arith.constant 64 : i32
    %38 = arith.muli %arg1, %c64_i32 : i32
    %39 = tpu.iota {dimensions = array<i32: 0>} : vector<64x1xi32>
    %40 = vector.broadcast %38 : i32 to vector<64x1xi32>
    %41 = arith.addi %40, %39 : vector<64x1xi32>
    %c64_i32_19 = arith.constant 64 : i32
    %42 = vector.broadcast %c64_i32_19 : i32 to vector<64x1xi32>
    %43 = arith.cmpi slt, %41, %42 : vector<64x1xi32>
    %cst_20 = arith.constant 0.000000e+00 : f32
    %44 = vector.shape_cast %43 : vector<64x1xi1> to vector<64x1xi1>
    %45 = vector.broadcast %44 : vector<64x1xi1> to vector<64x128xi1>
    %46 = vector.broadcast %cst_20 : f32 to vector<64x128xf32>
    %47 = arith.select %45, %37, %46 : vector<64x128xi1>, vector<64x128xf32>
    %c0_21 = arith.constant 0 : index
    %c0_22 = arith.constant 0 : index
    %48 = vector.load %arg16[%c0_21, %c0_22] : memref<1x128xf32, #tpu.memory_space<vmem>>, vector<1x128xf32>
    %cst_23 = arith.constant dense<0.000000e+00> : vector<128xf32>
    %49 = vector.multi_reduction <add>, %47, %cst_23 [0] : vector<64x128xf32> to vector<128xf32>
    %50 = vector.shape_cast %49 : vector<128xf32> to vector<1x128xf32>
    %51 = arith.addf %48, %50 : vector<1x128xf32>
    %c0_24 = arith.constant 0 : index
    %c0_25 = arith.constant 0 : index
    %52 = vector.load %arg16[%c0_24, %c0_25] : memref<1x128xf32, #tpu.memory_space<vmem>>, vector<1x128xf32>
    tpu.vector_store %arg16[%c0_24, %c0_25], %51 {strides = array<i32>} : memref<1x128xf32, #tpu.memory_space<vmem>>, vector<1x128xf32>,
    %c0_i32_26 = arith.constant 0 : i32
    %53 = arith.cmpi eq, %arg1, %c0_i32_26 : i32
    %54 = arith.extui %53 : i1 to i32
    %c0_i32_27 = arith.constant 0 : i32
    %55 = arith.cmpi ne, %54, %c0_i32_27 : i32
    scf.if %55 {
      %c0_28 = arith.constant 0 : index
      %c0_29 = arith.constant 0 : index
      %56 = vector.load %arg16[%c0_28, %c0_29] : memref<1x128xf32, #tpu.memory_space<vmem>>, vector<1x128xf32>
      %cst_30 = arith.constant 1.562500e-02 : f32
      %57 = vector.broadcast %cst_30 : f32 to vector<1x128xf32>
      %58 = arith.mulf %56, %57 : vector<1x128xf32>
      %59 = math.log %58 : vector<1x128xf32>
      %cst_31 = arith.constant 3.000000e+00 : f32
      %60 = vector.broadcast %cst_31 : f32 to vector<1x128xf32>
      %61 = arith.divf %59, %60 : vector<1x128xf32>
      %62 = math.exp %61 : vector<1x128xf32>
      %c0_32 = arith.constant 0 : index
      %c0_33 = arith.constant 0 : index
      %63 = vector.load %arg9[%c0_32, %c0_33] : memref<128x32xf32, #tpu.memory_space<vmem>>, vector<128x32xf32>
      %cst_34 = arith.constant dense<0.000000e+00> : vector<1x32xf32>
      %64 = tpu.matmul %62, %63, %cst_34 {dimension_numbers = #tpu.dot_dimension_numbers<[1], [0], [0], [1], [0, 0, 1, 1], [], []>} : vector<1x128xf32>, vector<128x32xf32>, vector<1x32xf32> -> vector<1x32xf32>
      %c0_35 = arith.constant 0 : index
      %c0_36 = arith.constant 0 : index
      %65 = vector.load %arg10[%c0_35, %c0_36] : memref<1x32xf32, #tpu.memory_space<vmem>>, vector<1x32xf32>
      %66 = arith.mulf %64, %65 : vector<1x32xf32>
      %c0_37 = arith.constant 0 : index
      %c0_38 = arith.constant 0 : index
      %67 = vector.load %arg11[%c0_37, %c0_38] : memref<1x32xf32, #tpu.memory_space<vmem>>, vector<1x32xf32>
      %68 = arith.addf %66, %67 : vector<1x32xf32>
      %c0_39 = arith.constant 0 : index
      %c0_40 = arith.constant 0 : index
      %c0_41 = arith.constant 0 : index
      %69 = vector.load %arg14[%c0_39, %c0_40, %c0_41] : memref<1x1x32xf32, #tpu.memory_space<vmem>>, vector<1x1x32xf32>
      %70 = vector.shape_cast %69 : vector<1x1x32xf32> to vector<1x32xf32>
      %71 = vector.shape_cast %68 : vector<1x32xf32> to vector<1x1x32xf32>
      tpu.vector_store %arg14[%c0_39, %c0_40, %c0_41], %71 {strides = array<i32>} : memref<1x1x32xf32, #tpu.memory_space<vmem>>, vector<1x1x32xf32>,
      %c0_42 = arith.constant 0 : index
      %c0_43 = arith.constant 0 : index
      %72 = vector.load %arg12[%c0_42, %c0_43] : memref<32x23xf32, #tpu.memory_space<vmem>>, vector<32x23xf32>
      %cst_44 = arith.constant dense<0.000000e+00> : vector<1x23xf32>
      %73 = tpu.matmul %68, %72, %cst_44 {dimension_numbers = #tpu.dot_dimension_numbers<[1], [0], [0], [1], [0, 0, 1, 1], [], []>} : vector<1x32xf32>, vector<32x23xf32>, vector<1x23xf32> -> vector<1x23xf32>
      %c0_45 = arith.constant 0 : index
      %c0_46 = arith.constant 0 : index
      %74 = vector.load %arg13[%c0_45, %c0_46] : memref<1x23xf32, #tpu.memory_space<vmem>>, vector<1x23xf32>
      %75 = arith.addf %73, %74 : vector<1x23xf32>
      %c0_47 = arith.constant 0 : index
      %c0_48 = arith.constant 0 : index
      %c0_49 = arith.constant 0 : index
      %76 = vector.load %arg15[%c0_47, %c0_48, %c0_49] : memref<1x1x23xf32, #tpu.memory_space<vmem>>, vector<1x1x23xf32>
      %77 = vector.shape_cast %76 : vector<1x1x23xf32> to vector<1x23xf32>
      %78 = vector.shape_cast %75 : vector<1x23xf32> to vector<1x1x23xf32>
      tpu.vector_store %arg15[%c0_47, %c0_48, %c0_49], %78 {strides = array<i32>} : memref<1x1x23xf32, #tpu.memory_space<vmem>>, vector<1x1x23xf32>,
    } else {
    }
    return
  }
  func.func @transform_0(%arg0: i32, %arg1: i32) -> (i32, i32, i32) {
    %c0_i32 = arith.constant 0 : i32
    %c0_i32_0 = arith.constant 0 : i32
    return %arg0, %arg1, %c0_i32 : i32, i32, i32
  }
  func.func @transform_1(%arg0: i32, %arg1: i32) -> (i32, i32) {
    %c0_i32 = arith.constant 0 : i32
    %c0_i32_0 = arith.constant 0 : i32
    %c0_i32_1 = arith.constant 0 : i32
    return %c0_i32, %c0_i32_0 : i32, i32
  }
  func.func @transform_2(%arg0: i32, %arg1: i32) -> (i32, i32) {
    %c0_i32 = arith.constant 0 : i32
    %c0_i32_0 = arith.constant 0 : i32
    %c0_i32_1 = arith.constant 0 : i32
    return %c0_i32, %c0_i32_0 : i32, i32
  }
  func.func @transform_3(%arg0: i32, %arg1: i32) -> (i32, i32) {
    %c0_i32 = arith.constant 0 : i32
    %c0_i32_0 = arith.constant 0 : i32
    %c0_i32_1 = arith.constant 0 : i32
    return %c0_i32, %c0_i32_0 : i32, i32
  }
  func.func @transform_4(%arg0: i32, %arg1: i32) -> (i32, i32) {
    %c0_i32 = arith.constant 0 : i32
    %c0_i32_0 = arith.constant 0 : i32
    %c0_i32_1 = arith.constant 0 : i32
    return %c0_i32, %c0_i32_0 : i32, i32
  }
  func.func @transform_5(%arg0: i32, %arg1: i32) -> (i32, i32) {
    %c0_i32 = arith.constant 0 : i32
    %c0_i32_0 = arith.constant 0 : i32
    %c0_i32_1 = arith.constant 0 : i32
    return %c0_i32, %c0_i32_0 : i32, i32
  }
  func.func @transform_6(%arg0: i32, %arg1: i32) -> (i32, i32) {
    %c0_i32 = arith.constant 0 : i32
    %c0_i32_0 = arith.constant 0 : i32
    %c0_i32_1 = arith.constant 0 : i32
    return %c0_i32, %c0_i32_0 : i32, i32
  }
  func.func @transform_7(%arg0: i32, %arg1: i32) -> (i32, i32) {
    %c0_i32 = arith.constant 0 : i32
    %c0_i32_0 = arith.constant 0 : i32
    %c0_i32_1 = arith.constant 0 : i32
    return %c0_i32, %c0_i32_0 : i32, i32
  }
  func.func @transform_8(%arg0: i32, %arg1: i32) -> (i32, i32) {
    %c0_i32 = arith.constant 0 : i32
    %c0_i32_0 = arith.constant 0 : i32
    %c0_i32_1 = arith.constant 0 : i32
    return %c0_i32, %c0_i32_0 : i32, i32
  }
  func.func @transform_9(%arg0: i32, %arg1: i32) -> (i32, i32) {
    %c0_i32 = arith.constant 0 : i32
    %c0_i32_0 = arith.constant 0 : i32
    %c0_i32_1 = arith.constant 0 : i32
    return %c0_i32, %c0_i32_0 : i32, i32
  }
  func.func @transform_10(%arg0: i32, %arg1: i32) -> (i32, i32) {
    %c0_i32 = arith.constant 0 : i32
    %c0_i32_0 = arith.constant 0 : i32
    %c0_i32_1 = arith.constant 0 : i32
    return %c0_i32, %c0_i32_0 : i32, i32
  }
  func.func @transform_11(%arg0: i32, %arg1: i32) -> (i32, i32) {
    %c0_i32 = arith.constant 0 : i32
    %c0_i32_0 = arith.constant 0 : i32
    %c0_i32_1 = arith.constant 0 : i32
    return %c0_i32, %c0_i32_0 : i32, i32
  }
  func.func @transform_12(%arg0: i32, %arg1: i32) -> (i32, i32, i32) {
    %c0_i32 = arith.constant 0 : i32
    %c0_i32_0 = arith.constant 0 : i32
    %c0_i32_1 = arith.constant 0 : i32
    return %arg0, %c0_i32, %c0_i32_0 : i32, i32, i32
  }
  func.func @transform_13(%arg0: i32, %arg1: i32) -> (i32, i32, i32) {
    %c0_i32 = arith.constant 0 : i32
    %c0_i32_0 = arith.constant 0 : i32
    %c0_i32_1 = arith.constant 0 : i32
    return %arg0, %c0_i32, %c0_i32_0 : i32, i32, i32
  }
}

</mosaic_0001>

<llo_original>
// kernel: enet_forward.1
$region0: #{enet_forward.1}
  #allocation0 [shape = 'u32[]', space=smem, size = 0x4, offset = 0x4, fixed_abs, tag = 'smem constant byte address 0x4 - core index']
  #allocation1 [shape = 'u32[144,128]{1,0:T(1,128)}', space=vmem, size = 0x12000, scoped, tag = 'internal scratch']
  #allocation2 [shape = 'f32[1,128]{1,0:T(1,128)}', space=vmem, size = 0x200, scoped, tag = 'scratch operand']
  %s0 = inlined_call_operand.vmem [shape: bf16[2,64,128], index: 0, kind: input, shape index: {}]
  %s1 = inlined_call_operand.vmem [shape: bf16[128,128], index: 1, kind: input, shape index: {}]
  %s2 = inlined_call_operand.vmem [shape: f32[1,128], index: 2, kind: input, shape index: {}]
  %s3 = inlined_call_operand.vmem [shape: f32[1,128], index: 3, kind: input, shape index: {}]
  %s4 = inlined_call_operand.vmem [shape: bf16[128,128], index: 4, kind: input, shape index: {}]
  %s5 = inlined_call_operand.vmem [shape: f32[1,128], index: 5, kind: input, shape index: {}]
  %s6 = inlined_call_operand.vmem [shape: f32[1,128], index: 6, kind: input, shape index: {}]
  %s7 = inlined_call_operand.vmem [shape: f32[128,32], index: 7, kind: input, shape index: {}]
  %s8 = inlined_call_operand.vmem [shape: f32[1,32], index: 8, kind: input, shape index: {}]
  %s9 = inlined_call_operand.vmem [shape: f32[1,32], index: 9, kind: input, shape index: {}]
  %s10 = inlined_call_operand.vmem [shape: f32[32,23], index: 10, kind: input, shape index: {}]
  %s11 = inlined_call_operand.vmem [shape: f32[1,23], index: 11, kind: input, shape index: {}]
  %s12 = inlined_call_operand.hbm [shape: f32[2,1,32], index: 12, kind: output, shape index: {0}]
  %s13 = inlined_call_operand.hbm [shape: f32[2,1,23], index: 13, kind: output, shape index: {1}]
  %14 = xla_tuple %s12, %s13
  %s15 = sld [smem:[#allocation0]]
  $region97: #{enet_forward.1} parent=0
    _
  %s17 = ssub.s32 1, %s15
  %s18 = scalar_select 0, %s17, %s15
  $region1: #{enet_forward.1} parent=0
    #allocation3 [shape = 'u8[1024]{0}', space=vmem, size = 0x400, scoped, tag = 'output window, operand 0']
    #allocation4 [shape = 's32[2]{0}', space=sflag, size = 0x8, scoped, tag = 'scoped memory for enet_forward.1']
    #allocation5 [shape = 'u8[1024]{0}', space=vmem, size = 0x400, scoped, tag = 'output window, operand 1']
    #allocation6 [shape = 's32[2]{0}', space=sflag, size = 0x8, scoped, tag = 'scoped memory for enet_forward.1']
    %19 = vsyncpa [#allocation4], 0
    %s20 = scalar_lea.sflag [#allocation4], 1
    %21 = vsyncpa %s20, 0
    %22 = vsyncpa [#allocation6], 0
    %s23 = scalar_lea.sflag [#allocation6], 1
    %24 = vsyncpa %s23, 0
    loop: start=0, step=1, limit=4
    $region2: #{enet_forward.1} parent=1 // loop_pre_header
      _
    $region3: #{enet_forward.1} parent=1 // loop_header
      %s26 = sphi 0, %s30
      %p27 = scmp.ge.s32.totalorder %s26, 4
      %s33 = sphi 0, %s45
      %s34 = sphi 0, %s41
      %s35 = sphi 0, %s33
      %s36 = sphi 0, %s34
      %s37 = sphi 0, %s35
      %s38 = sphi 0, %s36
      %s50 = sphi 0, %s52
      %s53 = sphi 0, %s50
      %s54 = sphi 0, %s53
      %s70 = sphi 0, %s54
      %s74 = sphi 0, %s74
      %s76 = sphi 0, %s74
      %s77 = sphi 0, %s76
      %s91 = sphi 0, %s77
      %s95 = sphi 0, %s95
      %s97 = sphi 0, %s95
      %s98 = sphi 0, %s97
      %s112 = sphi 0, %s98
      %s116 = sphi 0, %s116
      %s118 = sphi 0, %s116
      %s119 = sphi 0, %s118
      %s133 = sphi 0, %s119
      %s137 = sphi 0, %s137
      %s139 = sphi 0, %s137
      %s140 = sphi 0, %s139
      %s154 = sphi 0, %s140
      %s158 = sphi 0, %s158
      %s160 = sphi 0, %s158
      %s161 = sphi 0, %s160
      %s175 = sphi 0, %s161
      %s179 = sphi 0, %s179
      %s181 = sphi 0, %s179
      %s182 = sphi 0, %s181
      %s196 = sphi 0, %s182
      %s200 = sphi 0, %s200
      %s202 = sphi 0, %s200
      %s203 = sphi 0, %s202
      %s217 = sphi 0, %s203
      %s221 = sphi 0, %s221
      %s223 = sphi 0, %s221
      %s224 = sphi 0, %s223
      %s238 = sphi 0, %s224
      %s242 = sphi 0, %s242
      %s244 = sphi 0, %s242
      %s245 = sphi 0, %s244
      %s259 = sphi 0, %s245
      %s263 = sphi 0, %s263
      %s265 = sphi 0, %s263
      %s266 = sphi 0, %s265
      %s280 = sphi 0, %s266
      %s284 = sphi 0, %s284
      %s286 = sphi 0, %s284
      %s287 = sphi 0, %s286
      %s301 = sphi 0, %s287
      %s307 = sphi 0, %s309
      %s310 = sphi 0, %s307
      %s311 = sphi 0, %s310
      %s327 = sphi 0, %s311
      %s333 = sphi 0, %s335
      %s336 = sphi 0, %s333
      %s337 = sphi 0, %s336
      %s353 = sphi 0, %s337
    $region4: #{enet_forward.1} parent=1 // loop_header_branch
      %29 = sbr.rel (%p27) target = $region8
    $region5: #{enet_forward.1} parent=1 // loop_body
      %s31 = ssub.s32 %s26, 1
      %s32 = ssub.s32 %s26, 2
      %s39 = sadd.s32 1, %s34
      %p40 = scmp.ge.s32.totalorder %s39, 1
      %s41 = scalar_select %p40, 0, %s39
      %s42 = sadd.s32 1, %s33
      %s43 = scalar_select %p40, %s42, %s33
      %p44 = scmp.ge.s32.totalorder %s43, 2
      %s45 = scalar_select %p44, 0, %s43
      %s46 = ssub.s32 %s33, %s45
      %s47 = ssub.s32 %s34, %s41
      %s48 = sor.u32 %s46, %s47
      %p49 = scmp.eq.s32.totalorder %s48, 0
      %s51 = sadd.s32 %s50, 1
      %s52 = scalar_select %p49, %s50, %s51
      %p55 = pneg %p49
      %p56 = scmp.eq.s32.totalorder %s26, 1
      %p57 = por %p55, %p56
      %p58 = scmp.ne.s32.totalorder %s50, %s53
      %p59 = scmp.eq.s32.totalorder %s26, 0
      %p60 = por %p58, %p59
      %p61 = scmp.ne.s32.totalorder %s50, %s53
      %p62 = scmp.eq.s32.totalorder %s31, 1
      %p63 = por %p61, %p62
      %p64 = scmp.ne.s32.totalorder %s53, %s54
      %p65 = scmp.eq.s32.totalorder %s31, 0
      %p66 = por %p64, %p65
      %p67 = scmp.ne.s32.totalorder %s53, %s54
      %p68 = scmp.eq.s32.totalorder %s32, 1
      %p69 = por %p67, %p68
      %p71 = scmp.ne.s32.totalorder %s54, %s70
      %p72 = scmp.eq.s32.totalorder %s32, 0
      %p73 = por %p71, %p72
      %s75 = sadd.s32 %s74, 1
      %p78 = scmp.eq.s32.totalorder %s26, 1
      %p79 = scmp.ne.s32.totalorder %s74, %s76
      %p80 = scmp.eq.s32.totalorder %s26, 0
      %p81 = por %p79, %p80
      %p82 = scmp.ne.s32.totalorder %s74, %s76
      %p83 = scmp.eq.s32.totalorder %s31, 1
      %p84 = por %p82, %p83
      %p85 = scmp.ne.s32.totalorder %s76, %s77
      %p86 = scmp.eq.s32.totalorder %s31, 0
      %p87 = por %p85, %p86
      %p88 = scmp.ne.s32.totalorder %s76, %s77
      %p89 = scmp.eq.s32.totalorder %s32, 1
      %p90 = por %p88, %p89
      %p92 = scmp.ne.s32.totalorder %s77, %s91
      %p93 = scmp.eq.s32.totalorder %s32, 0
      %p94 = por %p92, %p93
      %s96 = sadd.s32 %s95, 1
      %p99 = scmp.eq.s32.totalorder %s26, 1
      %p100 = scmp.ne.s32.totalorder %s95, %s97
      %p101 = scmp.eq.s32.totalorder %s26, 0
      %p102 = por %p100, %p101
      %p103 = scmp.ne.s32.totalorder %s95, %s97
      %p104 = scmp.eq.s32.totalorder %s31, 1
      %p105 = por %p103, %p104
      %p106 = scmp.ne.s32.totalorder %s97, %s98
      %p107 = scmp.eq.s32.totalorder %s31, 0
      %p108 = por %p106, %p107
      %p109 = scmp.ne.s32.totalorder %s97, %s98
      %p110 = scmp.eq.s32.totalorder %s32, 1
      %p111 = por %p109, %p110
      %p113 = scmp.ne.s32.totalorder %s98, %s112
      %p114 = scmp.eq.s32.totalorder %s32, 0
      %p115 = por %p113, %p114
      %s117 = sadd.s32 %s116, 1
      %p120 = scmp.eq.s32.totalorder %s26, 1
      %p121 = scmp.ne.s32.totalorder %s116, %s118
      %p122 = scmp.eq.s32.totalorder %s26, 0
      %p123 = por %p121, %p122
      %p124 = scmp.ne.s32.totalorder %s116, %s118
      %p125 = scmp.eq.s32.totalorder %s31, 1
      %p126 = por %p124, %p125
      %p127 = scmp.ne.s32.totalorder %s118, %s119
      %p128 = scmp.eq.s32.totalorder %s31, 0
      %p129 = por %p127, %p128
      %p130 = scmp.ne.s32.totalorder %s118, %s119
      %p131 = scmp.eq.s32.totalorder %s32, 1
      %p132 = por %p130, %p131
      %p134 = scmp.ne.s32.totalorder %s119, %s133
      %p135 = scmp.eq.s32.totalorder %s32, 0
      %p136 = por %p134, %p135
      %s138 = sadd.s32 %s137, 1
      %p141 = scmp.eq.s32.totalorder %s26, 1
      %p142 = scmp.ne.s32.totalorder %s137, %s139
      %p143 = scmp.eq.s32.totalorder %s26, 0
      %p144 = por %p142, %p143
      %p145 = scmp.ne.s32.totalorder %s137, %s139
      %p146 = scmp.eq.s32.totalorder %s31, 1
      %p147 = por %p145, %p146
      %p148 = scmp.ne.s32.totalorder %s139, %s140
      %p149 = scmp.eq.s32.totalorder %s31, 0
      %p150 = por %p148, %p149
      %p151 = scmp.ne.s32.totalorder %s139, %s140
      %p152 = scmp.eq.s32.totalorder %s32, 1
      %p153 = por %p151, %p152
      %p155 = scmp.ne.s32.totalorder %s140, %s154
      %p156 = scmp.eq.s32.totalorder %s32, 0
      %p157 = por %p155, %p156
      %s159 = sadd.s32 %s158, 1
      %p162 = scmp.eq.s32.totalorder %s26, 1
      %p163 = scmp.ne.s32.totalorder %s158, %s160
      %p164 = scmp.eq.s32.totalorder %s26, 0
      %p165 = por %p163, %p164
      %p166 = scmp.ne.s32.totalorder %s158, %s160
      %p167 = scmp.eq.s32.totalorder %s31, 1
      %p168 = por %p166, %p167
      %p169 = scmp.ne.s32.totalorder %s160, %s161
      %p170 = scmp.eq.s32.totalorder %s31, 0
      %p171 = por %p169, %p170
      %p172 = scmp.ne.s32.totalorder %s160, %s161
      %p173 = scmp.eq.s32.totalorder %s32, 1
      %p174 = por %p172, %p173
      %p176 = scmp.ne.s32.totalorder %s161, %s175
      %p177 = scmp.eq.s32.totalorder %s32, 0
      %p178 = por %p176, %p177
      %s180 = sadd.s32 %s179, 1
      %p183 = scmp.eq.s32.totalorder %s26, 1
      %p184 = scmp.ne.s32.totalorder %s179, %s181
      %p185 = scmp.eq.s32.totalorder %s26, 0
      %p186 = por %p184, %p185
      %p187 = scmp.ne.s32.totalorder %s179, %s181
      %p188 = scmp.eq.s32.totalorder %s31, 1
      %p189 = por %p187, %p188
      %p190 = scmp.ne.s32.totalorder %s181, %s182
      %p191 = scmp.eq.s32.totalorder %s31, 0
      %p192 = por %p190, %p191
      %p193 = scmp.ne.s32.totalorder %s181, %s182
      %p194 = scmp.eq.s32.totalorder %s32, 1
      %p195 = por %p193, %p194
      %p197 = scmp.ne.s32.totalorder %s182, %s196
      %p198 = scmp.eq.s32.totalorder %s32, 0
      %p199 = por %p197, %p198
      %s201 = sadd.s32 %s200, 1
      %p204 = scmp.eq.s32.totalorder %s26, 1
      %p205 = scmp.ne.s32.totalorder %s200, %s202
      %p206 = scmp.eq.s32.totalorder %s26, 0
      %p207 = por %p205, %p206
      %p208 = scmp.ne.s32.totalorder %s200, %s202
      %p209 = scmp.eq.s32.totalorder %s31, 1
      %p210 = por %p208, %p209
      %p211 = scmp.ne.s32.totalorder %s202, %s203
      %p212 = scmp.eq.s32.totalorder %s31, 0
      %p213 = por %p211, %p212
      %p214 = scmp.ne.s32.totalorder %s202, %s203
      %p215 = scmp.eq.s32.totalorder %s32, 1
      %p216 = por %p214, %p215
      %p218 = scmp.ne.s32.totalorder %s203, %s217
      %p219 = scmp.eq.s32.totalorder %s32, 0
      %p220 = por %p218, %p219
      %s222 = sadd.s32 %s221, 1
      %p225 = scmp.eq.s32.totalorder %s26, 1
      %p226 = scmp.ne.s32.totalorder %s221, %s223
      %p227 = scmp.eq.s32.totalorder %s26, 0
      %p228 = por %p226, %p227
      %p229 = scmp.ne.s32.totalorder %s221, %s223
      %p230 = scmp.eq.s32.totalorder %s31, 1
      %p231 = por %p229, %p230
      %p232 = scmp.ne.s32.totalorder %s223, %s224
      %p233 = scmp.eq.s32.totalorder %s31, 0
      %p234 = por %p232, %p233
      %p235 = scmp.ne.s32.totalorder %s223, %s224
      %p236 = scmp.eq.s32.totalorder %s32, 1
      %p237 = por %p235, %p236
      %p239 = scmp.ne.s32.totalorder %s224, %s238
      %p240 = scmp.eq.s32.totalorder %s32, 0
      %p241 = por %p239, %p240
      %s243 = sadd.s32 %s242, 1
      %p246 = scmp.eq.s32.totalorder %s26, 1
      %p247 = scmp.ne.s32.totalorder %s242, %s244
      %p248 = scmp.eq.s32.totalorder %s26, 0
      %p249 = por %p247, %p248
      %p250 = scmp.ne.s32.totalorder %s242, %s244
      %p251 = scmp.eq.s32.totalorder %s31, 1
      %p252 = por %p250, %p251
      %p253 = scmp.ne.s32.totalorder %s244, %s245
      %p254 = scmp.eq.s32.totalorder %s31, 0
      %p255 = por %p253, %p254
      %p256 = scmp.ne.s32.totalorder %s244, %s245
      %p257 = scmp.eq.s32.totalorder %s32, 1
      %p258 = por %p256, %p257
      %p260 = scmp.ne.s32.totalorder %s245, %s259
      %p261 = scmp.eq.s32.totalorder %s32, 0
      %p262 = por %p260, %p261
      %s264 = sadd.s32 %s263, 1
      %p267 = scmp.eq.s32.totalorder %s26, 1
      %p268 = scmp.ne.s32.totalorder %s263, %s265
      %p269 = scmp.eq.s32.totalorder %s26, 0
      %p270 = por %p268, %p269
      %p271 = scmp.ne.s32.totalorder %s263, %s265
      %p272 = scmp.eq.s32.totalorder %s31, 1
      %p273 = por %p271, %p272
      %p274 = scmp.ne.s32.totalorder %s265, %s266
      %p275 = scmp.eq.s32.totalorder %s31, 0
      %p276 = por %p274, %p275
      %p277 = scmp.ne.s32.totalorder %s265, %s266
      %p278 = scmp.eq.s32.totalorder %s32, 1
      %p279 = por %p277, %p278
      %p281 = scmp.ne.s32.totalorder %s266, %s280
      %p282 = scmp.eq.s32.totalorder %s32, 0
      %p283 = por %p281, %p282
      %s285 = sadd.s32 %s284, 1
      %p288 = scmp.eq.s32.totalorder %s26, 1
      %p289 = scmp.ne.s32.totalorder %s284, %s286
      %p290 = scmp.eq.s32.totalorder %s26, 0
      %p291 = por %p289, %p290
      %p292 = scmp.ne.s32.totalorder %s284, %s286
      %p293 = scmp.eq.s32.totalorder %s31, 1
      %p294 = por %p292, %p293
      %p295 = scmp.ne.s32.totalorder %s286, %s287
      %p296 = scmp.eq.s32.totalorder %s31, 0
      %p297 = por %p295, %p296
      %p298 = scmp.ne.s32.totalorder %s286, %s287
      %p299 = scmp.eq.s32.totalorder %s32, 1
      %p300 = por %p298, %p299
      %p302 = scmp.ne.s32.totalorder %s287, %s301
      %p303 = scmp.eq.s32.totalorder %s32, 0
      %p304 = por %p302, %p303
      %s305 = ssub.s32 %s33, %s45
      %p306 = scmp.eq.s32.totalorder %s305, 0
      %s308 = sadd.s32 %s307, 1
      %s309 = scalar_select %p306, %s307, %s308
      %p312 = pneg %p306
      %p313 = scmp.eq.s32.totalorder %s26, 1
      %p314 = por %p312, %p313
      %p315 = scmp.ne.s32.totalorder %s307, %s310
      %p316 = scmp.eq.s32.totalorder %s26, 0
      %p317 = por %p315, %p316
      %p318 = scmp.ne.s32.totalorder %s307, %s310
      %p319 = scmp.eq.s32.totalorder %s31, 1
      %p320 = por %p318, %p319
      %p321 = scmp.ne.s32.totalorder %s310, %s311
      %p322 = scmp.eq.s32.totalorder %s31, 0
      %p323 = por %p321, %p322
      %p324 = scmp.ne.s32.totalorder %s310, %s311
      %p325 = scmp.eq.s32.totalorder %s32, 1
      %p326 = por %p324, %p325
      %p328 = scmp.ne.s32.totalorder %s311, %s327
      %p329 = scmp.eq.s32.totalorder %s32, 0
      %p330 = por %p328, %p329
      %s331 = ssub.s32 %s33, %s45
      %p332 = scmp.eq.s32.totalorder %s331, 0
      %s334 = sadd.s32 %s333, 1
      %s335 = scalar_select %p332, %s333, %s334
      %p338 = pneg %p332
      %p339 = scmp.eq.s32.totalorder %s26, 1
      %p340 = por %p338, %p339
      %p341 = scmp.ne.s32.totalorder %s333, %s336
      %p342 = scmp.eq.s32.totalorder %s26, 0
      %p343 = por %p341, %p342
      %p344 = scmp.ne.s32.totalorder %s333, %s336
      %p345 = scmp.eq.s32.totalorder %s31, 1
      %p346 = por %p344, %p345
      %p347 = scmp.ne.s32.totalorder %s336, %s337
      %p348 = scmp.eq.s32.totalorder %s31, 0
      %p349 = por %p347, %p348
      %p350 = scmp.ne.s32.totalorder %s336, %s337
      %p351 = scmp.eq.s32.totalorder %s32, 1
      %p352 = por %p350, %p351
      %p354 = scmp.ne.s32.totalorder %s337, %s353
      %p355 = scmp.eq.s32.totalorder %s32, 0
      %p356 = por %p354, %p355
      %p357 = scmp.le.s32.totalorder 1, %s26
      %p358 = scmp.lt.s32.totalorder %s26, 3
      %p359 = pnand %p357, %p358
      %p360 = pneg %p359
      // Predicated region
      $region9: #{enet_forward.1} parent=5 // pred_check
        _
      $region10: #{enet_forward.1} parent=5 // pred_check_branch
        %362 = sbr.rel (%p359) target = $region12
      $region11: #{enet_forward.1} parent=5 // pred_region
        %s363 = ssub.s32 %s26, 1
        // Predicated region
        $region13: #{enet_forward.1} parent=11 // pred_check
          %p364 = pneg %p87
        $region14: #{enet_forward.1} parent=11 // pred_check_branch
          %366 = sbr.rel (%p364) target = $region16
        $region15: #{enet_forward.1} parent=11 // pred_region
          _
        $region16: #{enet_forward.1} parent=11 // pred_fallthru
          _
        // Predicated region
        $region17: #{enet_forward.1} parent=11 // pred_check
          %p367 = pneg %p108
        $region18: #{enet_forward.1} parent=11 // pred_check_branch
          %369 = sbr.rel (%p367) target = $region20
        $region19: #{enet_forward.1} parent=11 // pred_region
          _
        $region20: #{enet_forward.1} parent=11 // pred_fallthru
          _
        // Predicated region
        $region21: #{enet_forward.1} parent=11 // pred_check
          %p370 = pneg %p129
        $region22: #{enet_forward.1} parent=11 // pred_check_branch
          %372 = sbr.rel (%p370) target = $region24
        $region23: #{enet_forward.1} parent=11 // pred_region
          _
        $region24: #{enet_forward.1} parent=11 // pred_fallthru
          _
        // Predicated region
        $region25: #{enet_forward.1} parent=11 // pred_check
          %p373 = pneg %p150
        $region26: #{enet_forward.1} parent=11 // pred_check_branch
          %375 = sbr.rel (%p373) target = $region28
        $region27: #{enet_forward.1} parent=11 // pred_region
          _
        $region28: #{enet_forward.1} parent=11 // pred_fallthru
          _
        // Predicated region
        $region29: #{enet_forward.1} parent=11 // pred_check
          %p376 = pneg %p171
        $region30: #{enet_forward.1} parent=11 // pred_check_branch
          %378 = sbr.rel (%p376) target = $region32
        $region31: #{enet_forward.1} parent=11 // pred_region
          _
        $region32: #{enet_forward.1} parent=11 // pred_fallthru
          _
        // Predicated region
        $region33: #{enet_forward.1} parent=11 // pred_check
          %p379 = pneg %p192
        $region34: #{enet_forward.1} parent=11 // pred_check_branch
          %381 = sbr.rel (%p379) target = $region36
        $region35: #{enet_forward.1} parent=11 // pred_region
          _
        $region36: #{enet_forward.1} parent=11 // pred_fallthru
          _
        // Predicated region
        $region37: #{enet_forward.1} parent=11 // pred_check
          %p382 = pneg %p213
        $region38: #{enet_forward.1} parent=11 // pred_check_branch
          %384 = sbr.rel (%p382) target = $region40
        $region39: #{enet_forward.1} parent=11 // pred_region
          _
        $region40: #{enet_forward.1} parent=11 // pred_fallthru
          _
        // Predicated region
        $region41: #{enet_forward.1} parent=11 // pred_check
          %p385 = pneg %p234
        $region42: #{enet_forward.1} parent=11 // pred_check_branch
          %387 = sbr.rel (%p385) target = $region44
        $region43: #{enet_forward.1} parent=11 // pred_region
          _
        $region44: #{enet_forward.1} parent=11 // pred_fallthru
          _
        // Predicated region
        $region45: #{enet_forward.1} parent=11 // pred_check
          %p388 = pneg %p255
        $region46: #{enet_forward.1} parent=11 // pred_check_branch
          %390 = sbr.rel (%p388) target = $region48
        $region47: #{enet_forward.1} parent=11 // pred_region
          _
        $region48: #{enet_forward.1} parent=11 // pred_fallthru
          _
        // Predicated region
        $region49: #{enet_forward.1} parent=11 // pred_check
          %p391 = pneg %p276
        $region50: #{enet_forward.1} parent=11 // pred_check_branch
          %393 = sbr.rel (%p391) target = $region52
        $region51: #{enet_forward.1} parent=11 // pred_region
          _
        $region52: #{enet_forward.1} parent=11 // pred_fallthru
          _
        // Predicated region
        $region53: #{enet_forward.1} parent=11 // pred_check
          %p394 = pneg %p297
        $region54: #{enet_forward.1} parent=11 // pred_check_branch
          %396 = sbr.rel (%p394) target = $region56
        $region55: #{enet_forward.1} parent=11 // pred_region
          _
        $region56: #{enet_forward.1} parent=11 // pred_fallthru
          _
      $region12: #{enet_forward.1} parent=5 // pred_fallthru
        _
      %p397 = scmp.lt.s32.totalorder %s26, 2
      // Predicated region
      $region57: #{enet_forward.1} parent=5 // pred_check
        %p398 = pneg %p397
      $region58: #{enet_forward.1} parent=5 // pred_check_branch
        %400 = sbr.rel (%p398) target = $region60
      $region59: #{enet_forward.1} parent=5 // pred_region
        // Predicated region
        $region61: #{enet_forward.1} parent=59 // pred_check
          %p401 = pneg %p60
        $region62: #{enet_forward.1} parent=59 // pred_check_branch
          %403 = sbr.rel (%p401) target = $region64
        $region63: #{enet_forward.1} parent=59 // pred_region
          %s404 = smul.u32 8, %s34
          %p405 = scmp.lt.s32.totalorder %s33, 1
          %s406 = scalar_select %p405, %s33, 1
          %p407 = scmp.lt.s32.totalorder %s404, 7
          %s408 = scalar_select %p407, %s404, 7
          %s409 = smul.addr %s406, 8
          %s410 = sadd.s32 %s408, %s409
          %s411 = smul.addr %s410, 4
          %s412 = scalar_lea.vmem %s0, %s411
          %s413 = smul.u32 8, %s34
        $region64: #{enet_forward.1} parent=59 // pred_fallthru
          _
      $region60: #{enet_forward.1} parent=5 // pred_fallthru
        _
      %p414 = scmp.le.s32.totalorder 1, %s26
      %p415 = scmp.lt.s32.totalorder %s26, 3
      %p416 = pnand %p414, %p415
      %p417 = pneg %p416
      // Predicated region
      $region65: #{enet_forward.1} parent=5 // pred_check
        _
      $region66: #{enet_forward.1} parent=5 // pred_check_branch
        %419 = sbr.rel (%p416) target = $region68
      $region67: #{enet_forward.1} parent=5 // pred_region
        %s420 = ssub.s32 %s26, 1
        %s421 = smul.u32 8, %s36
        %p422 = scmp.lt.s32.totalorder %s35, 1
        %s423 = scalar_select %p422, %s35, 1
        %p424 = scmp.lt.s32.totalorder %s421, 7
        %s425 = scalar_select %p424, %s421, 7
        %s426 = smul.addr %s423, 8
        %s427 = sadd.s32 %s425, %s426
        %s428 = smul.addr %s427, 4
        %s429 = scalar_lea.vmem %s0, %s428
        %p430 = pneg %p66
        %p431 = pneg %p63
        %p432 = pneg %p87
        %p433 = pneg %p84
        %p434 = pneg %p108
        %p435 = pneg %p105
        %p436 = pneg %p129
        %p437 = pneg %p126
        %p438 = pneg %p150
        %p439 = pneg %p147
        %p440 = pneg %p171
        %p441 = pneg %p168
        %p442 = pneg %p192
        %p443 = pneg %p189
        %p444 = pneg %p213
        %p445 = pneg %p210
        %p446 = pneg %p234
        %p447 = pneg %p231
        %p448 = pneg %p255
        %p449 = pneg %p252
        %p450 = pneg %p276
        %p451 = pneg %p273
        %p452 = pneg %p297
        %p453 = pneg %p294
        %p454 = pneg %p323
        %p455 = pneg %p320
        %s456 = sand.u32 %s310, 1
        %s457 = scalar_lea.sflag [#allocation4], %s456
        %s458 = sand.u32 %s310, 1
        %s459 = scalar_lea.vmem [#allocation3], %s458
        %p460 = pneg %p349
        %p461 = pneg %p346
        %s462 = sand.u32 %s336, 1
        %s463 = scalar_lea.sflag [#allocation6], %s462
        %s464 = sand.u32 %s336, 1
        %s465 = scalar_lea.vmem [#allocation5], %s464
        %s466 = smul.u32 8, %s36
        %p467 = scmp.lt.s32.totalorder %s35, 1
        %s468 = scalar_select %p467, %s35, 1
        %p469 = scmp.lt.s32.totalorder %s466, 7
        %s470 = scalar_select %p469, %s466, 7
        %s471 = smul.addr %s468, 8
        %s472 = sadd.s32 %s470, %s471
        %s473 = smul.addr %s472, 4
        %s474 = scalar_lea.vmem %s0, %s473
        %s475 = smul.u32 8, %s36
        %p477 = scmp.eq.s32.totalorder %s36, 0
        // Predicated region
        $region69: #{enet_forward.1} parent=67 // pred_check
          %p478 = pneg %p477
        $region70: #{enet_forward.1} parent=67 // pred_check_branch
          %480 = sbr.rel (%p478) target = $region72
        $region71: #{enet_forward.1} parent=67 // pred_region
          %481 = vst [vmem:[#allocation2] sm:$0x1] 0.0
        $region72: #{enet_forward.1} parent=67 // pred_fallthru
          _
        %v482 = vld [vmem:[%s474] sm:$0xf]
        %v483 = vld [vmem:[%s474 + $0x4] sm:$0xf]
        %v484 = vld [vmem:[%s474 + $0x8] sm:$0xf]
        %v485 = vld [vmem:[%s474 + $0xc] sm:$0xf]
        %v486 = vld [vmem:[%s474 + $0x10] sm:$0xf]
        %v487 = vld [vmem:[%s474 + $0x14] sm:$0xf]
        %v488 = vld [vmem:[%s474 + $0x18] sm:$0xf]
        %v489 = vld [vmem:[%s474 + $0x1c] sm:$0xf]
        %v490 = vld [vmem:[%s1] sm:$0xf]
        %v491 = vld [vmem:[%s1 + $0x4] sm:$0xf]
        %v492 = vld [vmem:[%s1 + $0x8] sm:$0xf]
        %v493 = vld [vmem:[%s1 + $0xc] sm:$0xf]
        %v494 = vld [vmem:[%s1 + $0x10] sm:$0xf]
        %v495 = vld [vmem:[%s1 + $0x14] sm:$0xf]
        %v496 = vld [vmem:[%s1 + $0x18] sm:$0xf]
        %v497 = vld [vmem:[%s1 + $0x1c] sm:$0xf]
        %v498 = vld [vmem:[%s1 + $0x20] sm:$0xf]
        %v499 = vld [vmem:[%s1 + $0x24] sm:$0xf]
        %v500 = vld [vmem:[%s1 + $0x28] sm:$0xf]
        %v501 = vld [vmem:[%s1 + $0x2c] sm:$0xf]
        %v502 = vld [vmem:[%s1 + $0x30] sm:$0xf]
        %v503 = vld [vmem:[%s1 + $0x34] sm:$0xf]
        %v504 = vld [vmem:[%s1 + $0x38] sm:$0xf]
        %v505 = vld [vmem:[%s1 + $0x3c] sm:$0xf]
        %v514 = vunpack.c.l.b16 %v482
        %v515 = vunpack.c.l.b16 %v483
        %v516 = vunpack.c.l.b16 %v484
        %v517 = vunpack.c.l.b16 %v485
        %v518 = vunpack.c.l.b16 %v486
        %v519 = vunpack.c.l.b16 %v487
        %v520 = vunpack.c.l.b16 %v488
        %v521 = vunpack.c.l.b16 %v489
        %v522 = vpack.c.b16 %v515, %v514
        %v523 = vpack.c.b16 %v517, %v516
        %v524 = vpack.c.b16 %v519, %v518
        %v525 = vpack.c.b16 %v521, %v520
        %v546 = vunpack.c.l.b16 %v490
        %v547 = vunpack.c.l.b16 %v491
        %v548 = vunpack.c.l.b16 %v492
        %v549 = vunpack.c.l.b16 %v493
        %v550 = vunpack.c.l.b16 %v494
        %v551 = vunpack.c.l.b16 %v495
        %v552 = vunpack.c.l.b16 %v496
        %v553 = vunpack.c.l.b16 %v497
        %v554 = vunpack.c.l.b16 %v498
        %v555 = vunpack.c.l.b16 %v499
        %v556 = vunpack.c.l.b16 %v500
        %v557 = vunpack.c.l.b16 %v501
        %v558 = vunpack.c.l.b16 %v502
        %v559 = vunpack.c.l.b16 %v503
        %v560 = vunpack.c.l.b16 %v504
        %v561 = vunpack.c.l.b16 %v505
        %v562 = vpack.c.b16 %v547, %v546
        %v563 = vpack.c.b16 %v549, %v548
        %v564 = vpack.c.b16 %v551, %v550
        %v565 = vpack.c.b16 %v553, %v552
        %v566 = vpack.c.b16 %v555, %v554
        %v567 = vpack.c.b16 %v557, %v556
        %v568 = vpack.c.b16 %v559, %v558
        %v569 = vpack.c.b16 %v561, %v560
        %578 = vmatprep.subr.bf16.mxu0 0
        %579 = vmatpush1.bf16.msra.mxu0 %v569
        %580 = vmatprep.subr.bf16.mxu0 0
        %581 = vmatpush1.bf16.msra.mxu0 %v568
        %582 = vmatprep.subr.bf16.mxu0 0
        %583 = vmatpush1.bf16.msra.mxu0 %v567
        %584 = vmatprep.subr.bf16.mxu0 0
        %585 = vmatpush1.bf16.msra.mxu0 %v566
        %586 = vmatprep.subr.bf16.mxu0 0
        %587 = vmatpush1.bf16.msra.mxu0 %v565
        %588 = vmatprep.subr.bf16.mxu0 0
        %589 = vmatpush1.bf16.msra.mxu0 %v564
        %590 = vmatprep.subr.bf16.mxu0 0
        %591 = vmatpush1.bf16.msra.mxu0 %v563
        %592 = vmatprep.subr.bf16.mxu0 0
        %593 = vmatpush1.bf16.msra.mxu0 %v562
        %594 = vmatprep.subr.bf16.mxu0 0
        %595 = vmatpush2.bf16.msra.mxu0 0
        %596 = vmatprep.subr.bf16.mxu0 0
        %597 = vmatpush2.bf16.msra.mxu0 0
        %598 = vmatprep.subr.bf16.mxu0 0
        %599 = vmatpush2.bf16.msra.mxu0 0
        %600 = vmatprep.subr.bf16.mxu0 0
        %601 = vmatpush2.bf16.msra.mxu0 0
        %602 = vmatprep.subr.bf16.mxu0 0
        %603 = vmatpush2.bf16.msra.mxu0 0
        %604 = vmatprep.subr.bf16.mxu0 0
        %605 = vmatpush2.bf16.msra.mxu0 0
        %606 = vmatprep.subr.bf16.mxu0 0
        %607 = vmatpush2.bf16.msra.mxu0 0
        %608 = vmatprep.subr.bf16.mxu0 0
        %609 = vmatpush2.bf16.msra.mxu0 0
        %610 = vmatprep.mubr.bf16.mxu0 0
        %611 = vmatmul.mubr.bf16.gmra.mxu0 %v522
        %v612 = vpop.f32.mrf.mxu0
        %v613 = vadd.f32 0.0, %v612
        %v614 = vpop.f32.mrf.mxu0
        %v615 = vpop.f32.mrf.mxu0
        %v616 = vadd.f32 0.0, %v615
        %v617 = vpop.f32.mrf.mxu0
        %618 = vmatprep.mubr.bf16.mxu0 0
        %619 = vmatmul.mubr.bf16.gmra.mxu0 %v523
        %v620 = vpop.f32.mrf.mxu0
        %v621 = vadd.f32 0.0, %v620
        %v622 = vpop.f32.mrf.mxu0
        %v623 = vpop.f32.mrf.mxu0
        %v624 = vadd.f32 0.0, %v623
        %v625 = vpop.f32.mrf.mxu0
        %626 = vmatprep.mubr.bf16.mxu0 0
        %627 = vmatmul.mubr.bf16.gmra.mxu0 %v524
        %v628 = vpop.f32.mrf.mxu0
        %v629 = vadd.f32 0.0, %v628
        %v630 = vpop.f32.mrf.mxu0
        %v631 = vpop.f32.mrf.mxu0
        %v632 = vadd.f32 0.0, %v631
        %v633 = vpop.f32.mrf.mxu0
        %634 = vmatprep.mubr.bf16.mxu0 0
        %635 = vmatmul.mubr.bf16.gmra.mxu0 %v525
        %v636 = vpop.f32.mrf.mxu0
        %v637 = vadd.f32 0.0, %v636
        %v638 = vpop.f32.mrf.mxu0
        %v639 = vpop.f32.mrf.mxu0
        %v640 = vadd.f32 0.0, %v639
        %v641 = vpop.f32.mrf.mxu0
        %642 = vdwg.mxu0
        %v643 = vld [vmem:[%s2] sm:$0x1]
        %v645 = vlaneseq
        %v646 = vshrl.u32 %v645, 7
        %v647 = vsub.s32 0, %v646
        %v648 = vrot.slane %v643, %v647
        %v650 = vmul.f32 %v613, %v648
        %v651 = vmul.f32 %v616, %v648
        %v652 = vmul.f32 %v621, %v648
        %v653 = vmul.f32 %v624, %v648
        %v654 = vmul.f32 %v629, %v648
        %v655 = vmul.f32 %v632, %v648
        %v656 = vmul.f32 %v637, %v648
        %v657 = vmul.f32 %v640, %v648
        %v658 = vld [vmem:[%s3] sm:$0x1]
        %v660 = vlaneseq
        %v661 = vshrl.u32 %v660, 7
        %v662 = vsub.s32 0, %v661
        %v663 = vrot.slane %v658, %v662
        %v665 = vadd.f32 %v650, %v663
        %v666 = vadd.f32 %v651, %v663
        %v667 = vadd.f32 %v652, %v663
        %v668 = vadd.f32 %v653, %v663
        %v669 = vadd.f32 %v654, %v663
        %v670 = vadd.f32 %v655, %v663
        %v671 = vadd.f32 %v656, %v663
        %v672 = vadd.f32 %v657, %v663
        %v673 = vxor.u32 %v665, 2147483648
        %v674 = vxor.u32 %v666, 2147483648
        %v675 = vxor.u32 %v667, 2147483648
        %v676 = vxor.u32 %v668, 2147483648
        %v677 = vxor.u32 %v669, 2147483648
        %v678 = vxor.u32 %v670, 2147483648
        %v679 = vxor.u32 %v671, 2147483648
        %v680 = vxor.u32 %v672, 2147483648
        %v681 = vmul.f32 %v673, 1.442695
        %v682 = vpow.pop %v681
        %v683 = vmul.f32 %v674, 1.442695
        %v684 = vpow.pop %v683
        %v685 = vmul.f32 %v675, 1.442695
        %v686 = vpow.pop %v685
        %v687 = vmul.f32 %v676, 1.442695
        %v688 = vpow.pop %v687
        %v689 = vmul.f32 %v677, 1.442695
        %v690 = vpow.pop %v689
        %v691 = vmul.f32 %v678, 1.442695
        %v692 = vpow.pop %v691
        %v693 = vmul.f32 %v679, 1.442695
        %v694 = vpow.pop %v693
        %v695 = vmul.f32 %v680, 1.442695
        %v696 = vpow.pop %v695
        %v697 = vadd.f32 %v682, 1.0
        %v698 = vadd.f32 %v684, 1.0
        %v699 = vadd.f32 %v686, 1.0
        %v700 = vadd.f32 %v688, 1.0
        %v701 = vadd.f32 %v690, 1.0
        %v702 = vadd.f32 %v692, 1.0
        %v703 = vadd.f32 %v694, 1.0
        %v704 = vadd.f32 %v696, 1.0
        %v705 = vrcp.pop %v697
        %v706 = vmul.f32 1.0, %v705
        %v707 = vrcp.pop %v698
        %v708 = vmul.f32 1.0, %v707
        %v709 = vrcp.pop %v699
        %v710 = vmul.f32 1.0, %v709
        %v711 = vrcp.pop %v700
        %v712 = vmul.f32 1.0, %v711
        %v713 = vrcp.pop %v701
        %v714 = vmul.f32 1.0, %v713
        %v715 = vrcp.pop %v702
        %v716 = vmul.f32 1.0, %v715
        %v717 = vrcp.pop %v703
        %v718 = vmul.f32 1.0, %v717
        %v719 = vrcp.pop %v704
        %v720 = vmul.f32 1.0, %v719
        %v721 = vmul.f32 %v665, %v706
        %v722 = vmul.f32 %v666, %v708
        %v723 = vmul.f32 %v667, %v710
        %v724 = vmul.f32 %v668, %v712
        %v725 = vmul.f32 %v669, %v714
        %v726 = vmul.f32 %v670, %v716
        %v727 = vmul.f32 %v671, %v718
        %v728 = vmul.f32 %v672, %v720
        %v729 = vpack.c.bf16 %v722, %v721
        %v730 = vpack.c.bf16 %v724, %v723
        %v731 = vpack.c.bf16 %v726, %v725
        %v732 = vpack.c.bf16 %v728, %v727
        %v733 = vld [vmem:[%s4] sm:$0xf]
        %v734 = vld [vmem:[%s4 + $0x4] sm:$0xf]
        %v735 = vld [vmem:[%s4 + $0x8] sm:$0xf]
        %v736 = vld [vmem:[%s4 + $0xc] sm:$0xf]
        %v737 = vld [vmem:[%s4 + $0x10] sm:$0xf]
        %v738 = vld [vmem:[%s4 + $0x14] sm:$0xf]
        %v739 = vld [vmem:[%s4 + $0x18] sm:$0xf]
        %v740 = vld [vmem:[%s4 + $0x1c] sm:$0xf]
        %v741 = vld [vmem:[%s4 + $0x20] sm:$0xf]
        %v742 = vld [vmem:[%s4 + $0x24] sm:$0xf]
        %v743 = vld [vmem:[%s4 + $0x28] sm:$0xf]
        %v744 = vld [vmem:[%s4 + $0x2c] sm:$0xf]
        %v745 = vld [vmem:[%s4 + $0x30] sm:$0xf]
        %v746 = vld [vmem:[%s4 + $0x34] sm:$0xf]
        %v747 = vld [vmem:[%s4 + $0x38] sm:$0xf]
        %v748 = vld [vmem:[%s4 + $0x3c] sm:$0xf]
        %v765 = vunpack.c.l.b16 %v733
        %v766 = vunpack.c.l.b16 %v734
        %v767 = vunpack.c.l.b16 %v735
        %v768 = vunpack.c.l.b16 %v736
        %v769 = vunpack.c.l.b16 %v737
        %v770 = vunpack.c.l.b16 %v738
        %v771 = vunpack.c.l.b16 %v739
        %v772 = vunpack.c.l.b16 %v740
        %v773 = vunpack.c.l.b16 %v741
        %v774 = vunpack.c.l.b16 %v742
        %v775 = vunpack.c.l.b16 %v743
        %v776 = vunpack.c.l.b16 %v744
        %v777 = vunpack.c.l.b16 %v745
        %v778 = vunpack.c.l.b16 %v746
        %v779 = vunpack.c.l.b16 %v747
        %v780 = vunpack.c.l.b16 %v748
        %v781 = vpack.c.b16 %v766, %v765
        %v782 = vpack.c.b16 %v768, %v767
        %v783 = vpack.c.b16 %v770, %v769
        %v784 = vpack.c.b16 %v772, %v771
        %v785 = vpack.c.b16 %v774, %v773
        %v786 = vpack.c.b16 %v776, %v775
        %v787 = vpack.c.b16 %v778, %v777
        %v788 = vpack.c.b16 %v780, %v779
        %797 = vmatprep.subr.bf16.mxu0 0
        %798 = vmatpush1.bf16.msra.mxu0 %v788
        %799 = vmatprep.subr.bf16.mxu0 0
        %800 = vmatpush1.bf16.msra.mxu0 %v787
        %801 = vmatprep.subr.bf16.mxu0 0
        %802 = vmatpush1.bf16.msra.mxu0 %v786
        %803 = vmatprep.subr.bf16.mxu0 0
        %804 = vmatpush1.bf16.msra.mxu0 %v785
        %805 = vmatprep.subr.bf16.mxu0 0
        %806 = vmatpush1.bf16.msra.mxu0 %v784
        %807 = vmatprep.subr.bf16.mxu0 0
        %808 = vmatpush1.bf16.msra.mxu0 %v783
        %809 = vmatprep.subr.bf16.mxu0 0
        %810 = vmatpush1.bf16.msra.mxu0 %v782
        %811 = vmatprep.subr.bf16.mxu0 0
        %812 = vmatpush1.bf16.msra.mxu0 %v781
        %813 = vmatprep.subr.bf16.mxu0 0
        %814 = vmatpush2.bf16.msra.mxu0 0
        %815 = vmatprep.subr.bf16.mxu0 0
        %816 = vmatpush2.bf16.msra.mxu0 0
        %817 = vmatprep.subr.bf16.mxu0 0
        %818 = vmatpush2.bf16.msra.mxu0 0
        %819 = vmatprep.subr.bf16.mxu0 0
        %820 = vmatpush2.bf16.msra.mxu0 0
        %821 = vmatprep.subr.bf16.mxu0 0
        %822 = vmatpush2.bf16.msra.mxu0 0
        %823 = vmatprep.subr.bf16.mxu0 0
        %824 = vmatpush2.bf16.msra.mxu0 0
        %825 = vmatprep.subr.bf16.mxu0 0
        %826 = vmatpush2.bf16.msra.mxu0 0
        %827 = vmatprep.subr.bf16.mxu0 0
        %828 = vmatpush2.bf16.msra.mxu0 0
        %829 = vmatprep.mubr.bf16.mxu0 0
        %830 = vmatmul.mubr.bf16.gmra.mxu0 %v729
        %v831 = vpop.f32.mrf.mxu0
        %v832 = vadd.f32 0.0, %v831
        %v833 = vpop.f32.mrf.mxu0
        %v834 = vpop.f32.mrf.mxu0
        %v835 = vadd.f32 0.0, %v834
        %v836 = vpop.f32.mrf.mxu0
        %837 = vmatprep.mubr.bf16.mxu0 0
        %838 = vmatmul.mubr.bf16.gmra.mxu0 %v730
        %v839 = vpop.f32.mrf.mxu0
        %v840 = vadd.f32 0.0, %v839
        %v841 = vpop.f32.mrf.mxu0
        %v842 = vpop.f32.mrf.mxu0
        %v843 = vadd.f32 0.0, %v842
        %v844 = vpop.f32.mrf.mxu0
        %845 = vmatprep.mubr.bf16.mxu0 0
        %846 = vmatmul.mubr.bf16.gmra.mxu0 %v731
        %v847 = vpop.f32.mrf.mxu0
        %v848 = vadd.f32 0.0, %v847
        %v849 = vpop.f32.mrf.mxu0
        %v850 = vpop.f32.mrf.mxu0
        %v851 = vadd.f32 0.0, %v850
        %v852 = vpop.f32.mrf.mxu0
        %853 = vmatprep.mubr.bf16.mxu0 0
        %854 = vmatmul.mubr.bf16.gmra.mxu0 %v732
        %v855 = vpop.f32.mrf.mxu0
        %v856 = vadd.f32 0.0, %v855
        %v857 = vpop.f32.mrf.mxu0
        %v858 = vpop.f32.mrf.mxu0
        %v859 = vadd.f32 0.0, %v858
        %v860 = vpop.f32.mrf.mxu0
        %861 = vdwg.mxu0
        %v862 = vld [vmem:[%s5] sm:$0x1]
        %v864 = vlaneseq
        %v865 = vshrl.u32 %v864, 7
        %v866 = vsub.s32 0, %v865
        %v867 = vrot.slane %v862, %v866
        %v869 = vmul.f32 %v832, %v867
        %v870 = vmul.f32 %v835, %v867
        %v871 = vmul.f32 %v840, %v867
        %v872 = vmul.f32 %v843, %v867
        %v873 = vmul.f32 %v848, %v867
        %v874 = vmul.f32 %v851, %v867
        %v875 = vmul.f32 %v856, %v867
        %v876 = vmul.f32 %v859, %v867
        %v877 = vld [vmem:[%s6] sm:$0x1]
        %v879 = vlaneseq
        %v880 = vshrl.u32 %v879, 7
        %v881 = vsub.s32 0, %v880
        %v882 = vrot.slane %v877, %v881
        %v884 = vadd.f32 %v869, %v882
        %v885 = vadd.f32 %v870, %v882
        %v886 = vadd.f32 %v871, %v882
        %v887 = vadd.f32 %v872, %v882
        %v888 = vadd.f32 %v873, %v882
        %v889 = vadd.f32 %v874, %v882
        %v890 = vadd.f32 %v875, %v882
        %v891 = vadd.f32 %v876, %v882
        %v892 = vxor.u32 %v884, 2147483648
        %v893 = vxor.u32 %v885, 2147483648
        %v894 = vxor.u32 %v886, 2147483648
        %v895 = vxor.u32 %v887, 2147483648
        %v896 = vxor.u32 %v888, 2147483648
        %v897 = vxor.u32 %v889, 2147483648
        %v898 = vxor.u32 %v890, 2147483648
        %v899 = vxor.u32 %v891, 2147483648
        %v900 = vmul.f32 %v892, 1.442695
        %v901 = vpow.pop %v900
        %v902 = vmul.f32 %v893, 1.442695
        %v903 = vpow.pop %v902
        %v904 = vmul.f32 %v894, 1.442695
        %v905 = vpow.pop %v904
        %v906 = vmul.f32 %v895, 1.442695
        %v907 = vpow.pop %v906
        %v908 = vmul.f32 %v896, 1.442695
        %v909 = vpow.pop %v908
        %v910 = vmul.f32 %v897, 1.442695
        %v911 = vpow.pop %v910
        %v912 = vmul.f32 %v898, 1.442695
        %v913 = vpow.pop %v912
        %v914 = vmul.f32 %v899, 1.442695
        %v915 = vpow.pop %v914
        %v916 = vadd.f32 %v901, 1.0
        %v917 = vadd.f32 %v903, 1.0
        %v918 = vadd.f32 %v905, 1.0
        %v919 = vadd.f32 %v907, 1.0
        %v920 = vadd.f32 %v909, 1.0
        %v921 = vadd.f32 %v911, 1.0
        %v922 = vadd.f32 %v913, 1.0
        %v923 = vadd.f32 %v915, 1.0
        %v924 = vrcp.pop %v916
        %v925 = vmul.f32 1.0, %v924
        %v926 = vrcp.pop %v917
        %v927 = vmul.f32 1.0, %v926
        %v928 = vrcp.pop %v918
        %v929 = vmul.f32 1.0, %v928
        %v930 = vrcp.pop %v919
        %v931 = vmul.f32 1.0, %v930
        %v932 = vrcp.pop %v920
        %v933 = vmul.f32 1.0, %v932
        %v934 = vrcp.pop %v921
        %v935 = vmul.f32 1.0, %v934
        %v936 = vrcp.pop %v922
        %v937 = vmul.f32 1.0, %v936
        %v938 = vrcp.pop %v923
        %v939 = vmul.f32 1.0, %v938
        %v940 = vmul.f32 %v884, %v925
        %v941 = vmul.f32 %v885, %v927
        %v942 = vmul.f32 %v886, %v929
        %v943 = vmul.f32 %v887, %v931
        %v944 = vmul.f32 %v888, %v933
        %v945 = vmul.f32 %v889, %v935
        %v946 = vmul.f32 %v890, %v937
        %v947 = vmul.f32 %v891, %v939
        %v948 = vmax.f32 %v940, 1e-06
        %v949 = vmax.f32 %v941, 1e-06
        %v950 = vmax.f32 %v942, 1e-06
        %v951 = vmax.f32 %v943, 1e-06
        %v952 = vmax.f32 %v944, 1e-06
        %v953 = vmax.f32 %v945, 1e-06
        %v954 = vmax.f32 %v946, 1e-06
        %v955 = vmax.f32 %v947, 1e-06
        %v956 = vmul.f32 %v948, %v948
        %v957 = vmul.f32 %v949, %v949
        %v958 = vmul.f32 %v950, %v950
        %v959 = vmul.f32 %v951, %v951
        %v960 = vmul.f32 %v952, %v952
        %v961 = vmul.f32 %v953, %v953
        %v962 = vmul.f32 %v954, %v954
        %v963 = vmul.f32 %v955, %v955
        %v964 = vmul.f32 %v956, %v948
        %v965 = vmul.f32 %v957, %v949
        %v966 = vmul.f32 %v958, %v950
        %v967 = vmul.f32 %v959, %v951
        %v968 = vmul.f32 %v960, %v952
        %v969 = vmul.f32 %v961, %v953
        %v970 = vmul.f32 %v962, %v954
        %v971 = vmul.f32 %v963, %v955
        %s972 = smul.u32 %s36, 64
        %v973 = vlaneseq
        %v974 = vshrl.u32 %v973, 7
        %v975 = vadd.s32 %v974, 8
        %v976 = vadd.s32 %v974, 16
        %v977 = vadd.s32 %v974, 24
        %v978 = vadd.s32 %v974, 32
        %v979 = vadd.s32 %v974, 40
        %v980 = vadd.s32 %v974, 48
        %v981 = vadd.s32 %v974, 56
        %v982 = vstv %s972
        %v983 = vadd.s32 %v982, %v974
        %v984 = vadd.s32 %v982, %v975
        %v985 = vadd.s32 %v982, %v976
        %v986 = vadd.s32 %v982, %v977
        %v987 = vadd.s32 %v982, %v978
        %v988 = vadd.s32 %v982, %v979
        %v989 = vadd.s32 %v982, %v980
        %v990 = vadd.s32 %v982, %v981
        %vm991 = vcmp.lt.s32.totalorder %v983, 64
        %vm992 = vcmp.lt.s32.totalorder %v984, 64
        %vm993 = vcmp.lt.s32.totalorder %v985, 64
        %vm994 = vcmp.lt.s32.totalorder %v986, 64
        %vm995 = vcmp.lt.s32.totalorder %v987, 64
        %vm996 = vcmp.lt.s32.totalorder %v988, 64
        %vm997 = vcmp.lt.s32.totalorder %v989, 64
        %vm998 = vcmp.lt.s32.totalorder %v990, 64
        %v999 = vsel %vm991, 1, 0
        %v1000 = vsel %vm992, 1, 0
        %v1001 = vsel %vm993, 1, 0
        %v1002 = vsel %vm994, 1, 0
        %v1003 = vsel %vm995, 1, 0
        %v1004 = vsel %vm996, 1, 0
        %v1005 = vsel %vm997, 1, 0
        %v1006 = vsel %vm998, 1, 0
        %vm1007 = vcmp.eq.s32.totalorder %v999, 1
        %vm1008 = vcmp.eq.s32.totalorder %v1000, 1
        %vm1009 = vcmp.eq.s32.totalorder %v1001, 1
        %vm1010 = vcmp.eq.s32.totalorder %v1002, 1
        %vm1011 = vcmp.eq.s32.totalorder %v1003, 1
        %vm1012 = vcmp.eq.s32.totalorder %v1004, 1
        %vm1013 = vcmp.eq.s32.totalorder %v1005, 1
        %vm1014 = vcmp.eq.s32.totalorder %v1006, 1
        %v1015 = vsel %vm1007, %v964, 0.0
        %v1016 = vsel %vm1008, %v965, 0.0
        %v1017 = vsel %vm1009, %v966, 0.0
        %v1018 = vsel %vm1010, %v967, 0.0
        %v1019 = vsel %vm1011, %v968, 0.0
        %v1020 = vsel %vm1012, %v969, 0.0
        %v1021 = vsel %vm1013, %v970, 0.0
        %v1022 = vsel %vm1014, %v971, 0.0
        %v1023 = vld [vmem:[#allocation2] sm:$0x1]
        %v1024 = vadd.f32 %v1015, %v1016
        %v1025 = vadd.f32 %v1024, %v1017
        %v1026 = vadd.f32 %v1025, %v1018
        %v1027 = vadd.f32 %v1026, %v1019
        %v1028 = vadd.f32 %v1027, %v1020
        %v1029 = vadd.f32 %v1028, %v1021
        %v1030 = vadd.f32 %v1029, %v1022
        %v1031 = vrot.slane %v1030, 4
        %v1032 = vadd.f32 %v1030, %v1031
        %v1033 = vrot.slane %v1032, 2
        %v1034 = vadd.f32 %v1032, %v1033
        %v1035 = vrot.slane %v1034, 1
        %v1036 = vadd.f32 %v1034, %v1035
        %v1037 = vadd.f32 %v1023, %v1036
        %1038 = vst [vmem:[#allocation2] sm:$0x1] %v1037
        // Predicated region
        $region73: #{enet_forward.1} parent=67 // pred_check
          %p1039 = pneg %p477
        $region74: #{enet_forward.1} parent=67 // pred_check_branch
          %1041 = sbr.rel (%p1039) target = $region76
        $region75: #{enet_forward.1} parent=67 // pred_region
          %v1042 = vld [vmem:[#allocation2] sm:$0x1]
          %v1043 = vmul.f32 %v1042, 0.015625
          %v1044 = vlog2.pop %v1043
          %v1045 = vmul.f32 %v1044, 0.6931472
          %v1046 = vrcp.pop 3.0
          %v1047 = vmul.f32 %v1045, %v1046
          %v1048 = vmul.f32 %v1047, 1.442695
          %v1049 = vpow.pop %v1048
          %v1050 = vld [vmem:[%s7] sm:$0xff]
          %v1051 = vld [vmem:[%s7 + $0x8] sm:$0xff]
          %v1052 = vld [vmem:[%s7 + $0x10] sm:$0xff]
          %v1053 = vld [vmem:[%s7 + $0x18] sm:$0xff]
          %v1054 = vld [vmem:[%s7 + $0x20] sm:$0xff]
          %v1055 = vld [vmem:[%s7 + $0x28] sm:$0xff]
          %v1056 = vld [vmem:[%s7 + $0x30] sm:$0xff]
          %v1057 = vld [vmem:[%s7 + $0x38] sm:$0xff]
          %v1058 = vld [vmem:[%s7 + $0x40] sm:$0xff]
          %v1059 = vld [vmem:[%s7 + $0x48] sm:$0xff]
          %v1060 = vld [vmem:[%s7 + $0x50] sm:$0xff]
          %v1061 = vld [vmem:[%s7 + $0x58] sm:$0xff]
          %v1062 = vld [vmem:[%s7 + $0x60] sm:$0xff]
          %v1063 = vld [vmem:[%s7 + $0x68] sm:$0xff]
          %v1064 = vld [vmem:[%s7 + $0x70] sm:$0xff]
          %v1065 = vld [vmem:[%s7 + $0x78] sm:$0xff]
          %1066 = vmatprep.subr.mxu0 0.0
          %1067 = vmatpush1.msra.mxu0 %v1065
          %1068 = vmatprep.subr.mxu0 0.0
          %1069 = vmatpush1.msra.mxu0 %v1064
          %1070 = vmatprep.subr.mxu0 0.0
          %1071 = vmatpush1.msra.mxu0 %v1063
          %1072 = vmatprep.subr.mxu0 0.0
          %1073 = vmatpush1.msra.mxu0 %v1062
          %1074 = vmatprep.subr.mxu0 0.0
          %1075 = vmatpush1.msra.mxu0 %v1061
          %1076 = vmatprep.subr.mxu0 0.0
          %1077 = vmatpush1.msra.mxu0 %v1060
          %1078 = vmatprep.subr.mxu0 0.0
          %1079 = vmatpush1.msra.mxu0 %v1059
          %1080 = vmatprep.subr.mxu0 0.0
          %1081 = vmatpush1.msra.mxu0 %v1058
          %1082 = vmatprep.subr.mxu0 0.0
          %1083 = vmatpush1.msra.mxu0 %v1057
          %1084 = vmatprep.subr.mxu0 0.0
          %1085 = vmatpush1.msra.mxu0 %v1056
          %1086 = vmatprep.subr.mxu0 0.0
          %1087 = vmatpush1.msra.mxu0 %v1055
          %1088 = vmatprep.subr.mxu0 0.0
          %1089 = vmatpush1.msra.mxu0 %v1054
          %1090 = vmatprep.subr.mxu0 0.0
          %1091 = vmatpush1.msra.mxu0 %v1053
          %1092 = vmatprep.subr.mxu0 0.0
          %1093 = vmatpush1.msra.mxu0 %v1052
          %1094 = vmatprep.subr.mxu0 0.0
          %1095 = vmatpush1.msra.mxu0 %v1051
          %1096 = vmatprep.subr.mxu0 0.0
          %1097 = vmatpush1.msra.mxu0 %v1050
          %1098 = vmatprep.subr.mxu0 0.0
          %1099 = vmatpush2.msra.mxu0 0.0
          %1100 = vmatprep.subr.mxu0 0.0
          %1101 = vmatpush2.msra.mxu0 0.0
          %1102 = vmatprep.subr.mxu0 0.0
          %1103 = vmatpush2.msra.mxu0 0.0
          %1104 = vmatprep.subr.mxu0 0.0
          %1105 = vmatpush2.msra.mxu0 0.0
          %1106 = vmatprep.subr.mxu0 0.0
          %1107 = vmatpush2.msra.mxu0 0.0
          %1108 = vmatprep.subr.mxu0 0.0
          %1109 = vmatpush2.msra.mxu0 0.0
          %1110 = vmatprep.subr.mxu0 0.0
          %1111 = vmatpush2.msra.mxu0 0.0
          %1112 = vmatprep.subr.mxu0 0.0
          %1113 = vmatpush2.msra.mxu0 0.0
          %1114 = vmatprep.subr.mxu0 0.0
          %1115 = vmatpush2.msra.mxu0 0.0
          %1116 = vmatprep.subr.mxu0 0.0
          %1117 = vmatpush2.msra.mxu0 0.0
          %1118 = vmatprep.subr.mxu0 0.0
          %1119 = vmatpush2.msra.mxu0 0.0
          %1120 = vmatprep.subr.mxu0 0.0
          %1121 = vmatpush2.msra.mxu0 0.0
          %1122 = vmatprep.subr.mxu0 0.0
          %1123 = vmatpush2.msra.mxu0 0.0
          %1124 = vmatprep.subr.mxu0 0.0
          %1125 = vmatpush2.msra.mxu0 0.0
          %1126 = vmatprep.subr.mxu0 0.0
          %1127 = vmatpush2.msra.mxu0 0.0
          %1128 = vmatprep.subr.mxu0 0.0
          %1129 = vmatpush2.msra.mxu0 0.0
          %1130 = vmatprep.mubr.f32.mxu0 0.0
          %1131 = vmatmul.mubr.f32.gmra.mxu0 %v1049
          %v1132 = vpop.f32.mrf.mxu0
          %v1133 = vadd.f32 0.0, %v1132
          %v1134 = vpop.f32.mrf.mxu0
          %1135 = vdwg.mxu0
          %v1136 = vld [vmem:[%s8] sm:$0x1]
          %v1137 = vmul.f32 %v1133, %v1136
          %v1138 = vld [vmem:[%s9] sm:$0x1]
          %v1139 = vadd.f32 %v1137, %v1138
          %vm1140 = vcmask 253952
          %1141 = vst.msk [vmem:[%s459] sm:$0x1] %vm1140, %v1139
          %v1142 = vld [vmem:[%s10] sm:$0xff]
          %v1143 = vld [vmem:[%s10 + $0x8] sm:$0xff]
          %v1144 = vld [vmem:[%s10 + $0x10] sm:$0xff]
          %v1145 = vld [vmem:[%s10 + $0x18] sm:$0xff]
          %v1146 = vld [vmem:[%s11] sm:$0x1]
          %vm1147 = vcmask 261120
          %v1149 = vsel %vm1147, %v1139, 0
          %1151 = vmatprep.subr.mxu0 0.0
          %1152 = vmatpush1.msra.mxu0 0.0
          %1153 = vmatprep.subr.mxu0 0.0
          %1154 = vmatpush1.msra.mxu0 0.0
          %1155 = vmatprep.subr.mxu0 0.0
          %1156 = vmatpush1.msra.mxu0 0.0
          %1157 = vmatprep.subr.mxu0 0.0
          %1158 = vmatpush1.msra.mxu0 0.0
          %1159 = vmatprep.subr.mxu0 0.0
          %1160 = vmatpush1.msra.mxu0 0.0
          %1161 = vmatprep.subr.mxu0 0.0
          %1162 = vmatpush1.msra.mxu0 0.0
          %1163 = vmatprep.subr.mxu0 0.0
          %1164 = vmatpush1.msra.mxu0 0.0
          %1165 = vmatprep.subr.mxu0 0.0
          %1166 = vmatpush1.msra.mxu0 0.0
          %1167 = vmatprep.subr.mxu0 0.0
          %1168 = vmatpush1.msra.mxu0 0.0
          %1169 = vmatprep.subr.mxu0 0.0
          %1170 = vmatpush1.msra.mxu0 0.0
          %1171 = vmatprep.subr.mxu0 0.0
          %1172 = vmatpush1.msra.mxu0 0.0
          %1173 = vmatprep.subr.mxu0 0.0
          %1174 = vmatpush1.msra.mxu0 0.0
          %1175 = vmatprep.subr.mxu0 0.0
          %1176 = vmatpush1.msra.mxu0 %v1145
          %1177 = vmatprep.subr.mxu0 0.0
          %1178 = vmatpush1.msra.mxu0 %v1144
          %1179 = vmatprep.subr.mxu0 0.0
          %1180 = vmatpush1.msra.mxu0 %v1143
          %1181 = vmatprep.subr.mxu0 0.0
          %1182 = vmatpush1.msra.mxu0 %v1142
          %1183 = vmatprep.subr.mxu0 0.0
          %1184 = vmatpush2.msra.mxu0 0.0
          %1185 = vmatprep.subr.mxu0 0.0
          %1186 = vmatpush2.msra.mxu0 0.0
          %1187 = vmatprep.subr.mxu0 0.0
          %1188 = vmatpush2.msra.mxu0 0.0
          %1189 = vmatprep.subr.mxu0 0.0
          %1190 = vmatpush2.msra.mxu0 0.0
          %1191 = vmatprep.subr.mxu0 0.0
          %1192 = vmatpush2.msra.mxu0 0.0
          %1193 = vmatprep.subr.mxu0 0.0
          %1194 = vmatpush2.msra.mxu0 0.0
          %1195 = vmatprep.subr.mxu0 0.0
          %1196 = vmatpush2.msra.mxu0 0.0
          %1197 = vmatprep.subr.mxu0 0.0
          %1198 = vmatpush2.msra.mxu0 0.0
          %1199 = vmatprep.subr.mxu0 0.0
          %1200 = vmatpush2.msra.mxu0 0.0
          %1201 = vmatprep.subr.mxu0 0.0
          %1202 = vmatpush2.msra.mxu0 0.0
          %1203 = vmatprep.subr.mxu0 0.0
          %1204 = vmatpush2.msra.mxu0 0.0
          %1205 = vmatprep.subr.mxu0 0.0
          %1206 = vmatpush2.msra.mxu0 0.0
          %1207 = vmatprep.subr.mxu0 0.0
          %1208 = vmatpush2.msra.mxu0 0.0
          %1209 = vmatprep.subr.mxu0 0.0
          %1210 = vmatpush2.msra.mxu0 0.0
          %1211 = vmatprep.subr.mxu0 0.0
          %1212 = vmatpush2.msra.mxu0 0.0
          %1213 = vmatprep.subr.mxu0 0.0
          %1214 = vmatpush2.msra.mxu0 0.0
          %1215 = vmatprep.mubr.f32.mxu0 0.0
          %1216 = vmatmul.mubr.f32.gmra.mxu0 %v1149
          %v1217 = vpop.f32.mrf.mxu0
          %v1218 = vadd.f32 %v1146, %v1217
          %v1219 = vpop.f32.mrf.mxu0
          %1220 = vdwg.mxu0
          %vm1221 = vcmask 180224
          %1222 = vst.msk [vmem:[%s465] sm:$0x1] %vm1221, %v1218
        $region76: #{enet_forward.1} parent=67 // pred_fallthru
          _
        %s1223 = sand.u32 %s310, 1
        %s1224 = scalar_lea.sflag [#allocation4], %s1223
        %s1225 = sand.u32 %s310, 1
        %s1226 = scalar_lea.vmem [#allocation3], %s1225
        %s1227 = sand.u32 %s336, 1
        %s1228 = scalar_lea.sflag [#allocation6], %s1227
        %s1229 = sand.u32 %s336, 1
        %s1230 = scalar_lea.vmem [#allocation5], %s1229
        // Predicated region
        $region77: #{enet_forward.1} parent=67 // pred_check
          %p1231 = pneg %p320
        $region78: #{enet_forward.1} parent=67 // pred_check_branch
          %1233 = sbr.rel (%p1231) target = $region80
        $region79: #{enet_forward.1} parent=67 // pred_region
          %s1235 = ssub.s32 16, 16
          %1236 = vsyncadd %s1224, %s1235
          %s1237 = smul.addr %s35, 16
          %s1238 = scalar_lea.hbm %s12, %s1237
          %s1240 = sshll.u32 %s1226, 4
          %s1241 = int_to_ptr.vmem [resolvable:$true] %s1240
          %1243 = dma.vmem_to_hbm [thread:$0]  %s1241, 16, %s1238, %s1224
        $region80: #{enet_forward.1} parent=67 // pred_fallthru
          _
        // Predicated region
        $region81: #{enet_forward.1} parent=67 // pred_check
          %p1244 = pneg %p346
        $region82: #{enet_forward.1} parent=67 // pred_check_branch
          %1246 = sbr.rel (%p1244) target = $region84
        $region83: #{enet_forward.1} parent=67 // pred_region
          %s1248 = ssub.s32 16, 16
          %1249 = vsyncadd %s1228, %s1248
          %s1250 = smul.addr %s35, 16
          %s1251 = scalar_lea.hbm %s13, %s1250
          %s1253 = sshll.u32 %s1230, 4
          %s1254 = int_to_ptr.vmem [resolvable:$true] %s1253
          %1256 = dma.vmem_to_hbm [thread:$0]  %s1254, 16, %s1251, %s1228
        $region84: #{enet_forward.1} parent=67 // pred_fallthru
          _
      $region68: #{enet_forward.1} parent=5 // pred_fallthru
        _
      %p1257 = scmp.le.s32.totalorder 2, %s26
      // Predicated region
      $region85: #{enet_forward.1} parent=5 // pred_check
        %p1258 = pneg %p1257
      $region86: #{enet_forward.1} parent=5 // pred_check_branch
        %1260 = sbr.rel (%p1258) target = $region88
      $region87: #{enet_forward.1} parent=5 // pred_region
        %s1261 = ssub.s32 %s26, 2
        // Predicated region
        $region89: #{enet_forward.1} parent=87 // pred_check
          %p1262 = pneg %p326
        $region90: #{enet_forward.1} parent=87 // pred_check_branch
          %1264 = sbr.rel (%p1262) target = $region92
        $region91: #{enet_forward.1} parent=87 // pred_region
          %s1265 = sand.u32 %s311, 1
          %s1266 = scalar_lea.sflag [#allocation4], %s1265
          %s1267 = sand.u32 %s311, 1
          %s1268 = scalar_lea.vmem [#allocation3], %s1267
          %1269 = dma.done %s1266, 16
        $region92: #{enet_forward.1} parent=87 // pred_fallthru
          _
        // Predicated region
        $region93: #{enet_forward.1} parent=87 // pred_check
          %p1270 = pneg %p352
        $region94: #{enet_forward.1} parent=87 // pred_check_branch
          %1272 = sbr.rel (%p1270) target = $region96
        $region95: #{enet_forward.1} parent=87 // pred_region
          %s1273 = sand.u32 %s337, 1
          %s1274 = scalar_lea.sflag [#allocation6], %s1273
          %s1275 = sand.u32 %s337, 1
          %s1276 = scalar_lea.vmem [#allocation5], %s1275
          %1277 = dma.done %s1274, 16
        $region96: #{enet_forward.1} parent=87 // pred_fallthru
          _
      $region88: #{enet_forward.1} parent=5 // pred_fallthru
        _
    $region6: #{enet_forward.1} parent=1 // loop_footer
      %s30 = sadd.s32 1, %s26
    $region7: #{enet_forward.1} parent=1 // loop_footer_branch
      %25 = sbr.rel target = $region3
    $region8: #{enet_forward.1} parent=1 // loop_exit
      _
    %1278 = vsyncpa [#allocation4], 1
    %s1279 = scalar_lea.sflag [#allocation4], 1
    %1280 = vsyncpa %s1279, 1
    %1281 = vsyncpa [#allocation6], 1
    %s1282 = scalar_lea.sflag [#allocation6], 1
    %1283 = vsyncpa %s1282, 1

</llo_original>
